<compile_context>
chip_gen: v5e
topology: v5e:2x2
jax: 0.10.0
libtpu: 0.0.40
codegen_flags: <defaults>
</compile_context>

<pallas_src>
import jax
import jax.numpy as jnp
from jax.experimental import pallas as pl
from jax.experimental.pallas import tpu as pltpu

IN_FEATURES = 8 * 8 * 8      # 512  (K)
OUT_FEATURES = 64 * 64       # 4096 (N)
TN = 1024                    # output-feature tile width (lane-dense, mult. of 128)


def _linear_kernel(x_ref, w_ref, b_ref, o_ref):
    # x_ref: (B, K)   f32, resident full block
    # w_ref: (K, TN)  bf16 weight tile (pre-transposed at load time)
    # b_ref: (1, TN)  f32 bias tile
    # o_ref: (B, TN)  f32 output tile
    acc = jnp.dot(
        x_ref[...].astype(jnp.bfloat16),      # bf16 x bf16 -> native MXU path
        w_ref[...],
        preferred_element_type=jnp.float32,   # f32 accumulation
    )
    o_ref[...] = acc + b_ref[...]


def linear_fcq_net_forward(x, weight_kn_bf16, bias_2d):
    """Forward pass of LinearFCQNet.

    Args:
      x:              (B, 8, 8, 8) float32
      weight_kn_bf16: (IN_FEATURES, OUT_FEATURES) bfloat16  (prepared by prepare_params)
      bias_2d:        (1, OUT_FEATURES) float32             (prepared by prepare_params)
    Returns:
      (B, OUT_FEATURES) float32
    """
    B = x.shape[0]
    x_flat = x.reshape(B, IN_FEATURES)        # nn.Flatten (C,H,W order)

    grid = (OUT_FEATURES // TN,)              # 4 parallel steps (2 per TC on v7x)

    flops = 2 * B * IN_FEATURES * OUT_FEATURES
    bytes_accessed = (
        2 * IN_FEATURES * OUT_FEATURES        # bf16 weight stream (dominant)
        + 4 * B * IN_FEATURES                 # activations in  (f32)
        + 4 * B * OUT_FEATURES                # activations out (f32)
        + 4 * OUT_FEATURES                    # bias            (f32)
    )

    return pl.pallas_call(
        _linear_kernel,
        out_shape=jax.ShapeDtypeStruct((B, OUT_FEATURES), jnp.float32),
        grid_spec=pltpu.PrefetchScalarGridSpec(
            num_scalar_prefetch=0,
            grid=grid,
            in_specs=[
                # x: full block, constant index -> resident, fetched once
                pl.BlockSpec((B, IN_FEATURES), lambda j: (0, 0)),
                # weight: (K, TN) tile, standard [B,K]x[K,TN] contraction
                pl.BlockSpec((IN_FEATURES, TN), lambda j: (0, j)),
                # bias: blocked (1, TN) tile -> no in-kernel dynamic lane slice
                pl.BlockSpec((1, TN), lambda j: (0, j)),
            ],
            out_specs=pl.BlockSpec((B, TN), lambda j: (0, j)),
        ),
        compiler_params=pltpu.CompilerParams(
            dimension_semantics=("parallel",),
            vmem_limit_bytes=13 * 1024 * 1024,   # pin well under v5e's 16 MiB scoped
        ),
        cost_estimate=pl.CostEstimate(
            flops=flops, transcendentals=0, bytes_accessed=bytes_accessed),
    )(x_flat, weight_kn_bf16, bias_2d)


def prepare_params(weight, bias):
    """ONE-TIME parameter preparation (do NOT call per forward pass).

    Converts PyTorch nn.Linear layout (OUT, IN) f32/f64 params into the
    kernel's streaming layout: weight -> (IN, OUT) bf16, bias -> (1, OUT) f32.
    """
    w_kn = jnp.asarray(weight, jnp.float32).T.astype(jnp.bfloat16)
    b_2d = jnp.asarray(bias, jnp.float32).reshape(1, OUT_FEATURES)
    return w_kn, b_2d


def init_params(key):
    """Deterministic init matching nn.Linear default (uniform +/- 1/sqrt(fan_in))."""
    kw, kb = jax.random.split(key)
    bound = 1.0 / jnp.sqrt(jnp.float32(IN_FEATURES))
    weight = jax.random.uniform(
        kw, (OUT_FEATURES, IN_FEATURES), jnp.float32, -bound, bound)
    bias = jax.random.uniform(
        kb, (OUT_FEATURES,), jnp.float32, -bound, bound)
    return weight, bias


if __name__ == "__main__":
    key = jax.random.PRNGKey(0)
    k_x, k_p = jax.random.split(key)

    B = 2
    x = jax.random.normal(k_x, (B, 8, 8, 8), jnp.float32)
    weight, bias = init_params(k_p)

    # one-time layout/dtype conversion at parameter load
    w_kn, b_2d = prepare_params(weight, bias)

    fwd = jax.jit(linear_fcq_net_forward)
    out = fwd(x, w_kn, b_2d)
    out = jax.block_until_ready(out)

    # sanity check against plain-JAX f32 reference (bf16 weight stream -> ~1e-3 rel)
    ref = x.reshape(B, IN_FEATURES) @ weight.T + bias
    assert out.shape == (B, OUT_FEATURES)
    assert jnp.allclose(out, ref, atol=3e-2, rtol=3e-2)

    print("KERNEL_OK")
</pallas_src>

<mosaic_0001>
module attributes {stable_mosaic.version = 11 : i64} {
  func.func @_linear_kernel(%arg0: i32, %arg1: memref<2x512xf32, #tpu.memory_space<vmem>>, %arg2: memref<512x1024xbf16, #tpu.memory_space<vmem>>, %arg3: memref<1x1024xf32, #tpu.memory_space<vmem>>, %arg4: memref<2x1024xf32, #tpu.memory_space<vmem>>) attributes {dimension_semantics = [#tpu.dimension_semantics<parallel>], iteration_bounds = array<i64: 4>, scalar_prefetch = 0 : i64, scratch_operands = 0 : i64, tpu.core_type = #tpu.core_type<tc>, window_params = [{pipeline_mode = #tpu.pipeline_mode<synchronous>, transform_indices = @transform_0, window_bounds = array<i64: 2, 512>}, {transform_indices = @transform_1, window_bounds = array<i64: 512, 1024>}, {transform_indices = @transform_2, window_bounds = array<i64: 1, 1024>}, {transform_indices = @transform_3, window_bounds = array<i64: 2, 1024>}]} {
    %c0 = arith.constant 0 : index
    %c0_0 = arith.constant 0 : index
    %0 = vector.load %arg1[%c0, %c0_0] : memref<2x512xf32, #tpu.memory_space<vmem>>, vector<2x512xf32>
    %1 = arith.truncf %0 : vector<2x512xf32> to vector<2x512xbf16>
    %c0_1 = arith.constant 0 : index
    %c0_2 = arith.constant 0 : index
    %2 = vector.load %arg2[%c0_1, %c0_2] : memref<512x1024xbf16, #tpu.memory_space<vmem>>, vector<512x1024xbf16>
    %cst = arith.constant dense<0.000000e+00> : vector<2x1024xf32>
    %3 = tpu.matmul %1, %2, %cst {dimension_numbers = #tpu.dot_dimension_numbers<[1], [0], [0], [1], [0, 0, 1, 1], [], []>} : vector<2x512xbf16>, vector<512x1024xbf16>, vector<2x1024xf32> -> vector<2x1024xf32>
    %c0_3 = arith.constant 0 : index
    %c0_4 = arith.constant 0 : index
    %4 = vector.load %arg3[%c0_3, %c0_4] : memref<1x1024xf32, #tpu.memory_space<vmem>>, vector<1x1024xf32>
    %5 = vector.broadcast %4 : vector<1x1024xf32> to vector<2x1024xf32>
    %6 = arith.addf %3, %5 : vector<2x1024xf32>
    %c0_5 = arith.constant 0 : index
    %c0_6 = arith.constant 0 : index
    %7 = vector.load %arg4[%c0_5, %c0_6] : memref<2x1024xf32, #tpu.memory_space<vmem>>, vector<2x1024xf32>
    tpu.vector_store %arg4[%c0_5, %c0_6], %6 {strides = array<i32>} : memref<2x1024xf32, #tpu.memory_space<vmem>>, vector<2x1024xf32>,
    return
  }
  func.func @transform_0(%arg0: i32) -> (i32, i32) {
    %c0_i32 = arith.constant 0 : i32
    %c0_i32_0 = arith.constant 0 : i32
    %c0_i32_1 = arith.constant 0 : i32
    return %c0_i32, %c0_i32_0 : i32, i32
  }
  func.func @transform_1(%arg0: i32) -> (i32, i32) {
    %c0_i32 = arith.constant 0 : i32
    %c0_i32_0 = arith.constant 0 : i32
    return %c0_i32, %arg0 : i32, i32
  }
  func.func @transform_2(%arg0: i32) -> (i32, i32) {
    %c0_i32 = arith.constant 0 : i32
    %c0_i32_0 = arith.constant 0 : i32
    return %c0_i32, %arg0 : i32, i32
  }
  func.func @transform_3(%arg0: i32) -> (i32, i32) {
    %c0_i32 = arith.constant 0 : i32
    %c0_i32_0 = arith.constant 0 : i32
    return %c0_i32, %arg0 : i32, i32
  }
}

</mosaic_0001>

<llo_original>
// kernel: linear_fcq_net_forward.1
$region0: #{linear_fcq_net_forward.1}
  #allocation0 [shape = 'u32[]', space=smem, size = 0x4, offset = 0x4, fixed_abs, tag = 'smem constant byte address 0x4 - core index']
  #allocation1 [shape = 'u32[72,128]{1,0:T(1,128)}', space=vmem, size = 0x9000, scoped, tag = 'internal scratch']
  %s0 = inlined_call_operand.vmem [shape: f32[2,512], index: 0, kind: input, shape index: {}]
  %s1 = inlined_call_operand.hbm [shape: bf16[512,4096], index: 1, kind: input, shape index: {}]
  %s2 = inlined_call_operand.hbm [shape: f32[1,4096], index: 2, kind: input, shape index: {}]
  %s3 = inlined_call_operand.hbm [shape: f32[2,4096], index: 3, kind: output, shape index: {}]
  %s4 = sld [smem:[#allocation0]]
  $region53: #{linear_fcq_net_forward.1} parent=0
    _
  %s6 = ssub.s32 1, %s4
  %s7 = scalar_select 0, %s6, %s4
  $region1: #{linear_fcq_net_forward.1} parent=0
    #allocation2 [shape = 'u8[2097152]{0}', space=vmem, size = 0x200000, scoped, tag = 'input window, operand 1']
    #allocation3 [shape = 's32[2]{0}', space=sflag, size = 0x8, scoped, tag = 'scoped memory for linear_fcq_net_forward.1']
    #allocation4 [shape = 's32[2]{0}', space=sflag, size = 0x8, scoped, tag = 'scoped memory for linear_fcq_net_forward.1']
    #allocation5 [shape = 'u8[8192]{0}', space=vmem, size = 0x2000, scoped, tag = 'input window, operand 2']
    #allocation6 [shape = 's32[2]{0}', space=sflag, size = 0x8, scoped, tag = 'scoped memory for linear_fcq_net_forward.1']
    #allocation7 [shape = 'u8[16384]{0}', space=vmem, size = 0x4000, scoped, tag = 'output window, operand 0']
    %8 = vsyncpa [#allocation3], 0
    %s9 = scalar_lea.sflag [#allocation3], 1
    %10 = vsyncpa %s9, 0
    %11 = vsyncpa [#allocation6], 0
    %s12 = scalar_lea.sflag [#allocation6], 1
    %13 = vsyncpa %s12, 0
    %14 = vsyncpa [#allocation4], 0
    %s15 = scalar_lea.sflag [#allocation4], 1
    %16 = vsyncpa %s15, 0
    loop: start=0, step=1, limit=6
    $region2: #{linear_fcq_net_forward.1} parent=1 // loop_pre_header
      _
    $region3: #{linear_fcq_net_forward.1} parent=1 // loop_header
      %s18 = sphi 0, %s22
      %p19 = scmp.ge.s32.totalorder %s18, 6
      %s26 = sphi 0, %s26
      %s28 = sphi 0, %s26
      %s29 = sphi 0, %s28
      %s43 = sphi 0, %s29
      %s49 = sphi 0, %s51
      %s52 = sphi 0, %s49
      %s53 = sphi 0, %s52
      %s69 = sphi 0, %s53
      %s75 = sphi 0, %s77
      %s78 = sphi 0, %s75
      %s79 = sphi 0, %s78
      %s95 = sphi 0, %s79
      %s101 = sphi 0, %s103
      %s104 = sphi 0, %s101
      %s105 = sphi 0, %s104
      %s121 = sphi 0, %s105
    $region4: #{linear_fcq_net_forward.1} parent=1 // loop_header_branch
      %21 = sbr.rel (%p19) target = $region8
    $region5: #{linear_fcq_net_forward.1} parent=1 // loop_body
      %s23 = ssub.s32 %s18, 1
      %s24 = ssub.s32 %s18, 2
      %s25 = sadd.s32 %s18, 1
      %s27 = sadd.s32 %s26, 1
      %p30 = scmp.eq.s32.totalorder %s18, 3
      %p31 = scmp.ne.s32.totalorder %s26, %s28
      %p32 = scmp.eq.s32.totalorder %s18, 0
      %p33 = por %p31, %p32
      %p34 = scmp.ne.s32.totalorder %s26, %s28
      %p35 = scmp.eq.s32.totalorder %s23, 3
      %p36 = por %p34, %p35
      %p37 = scmp.ne.s32.totalorder %s28, %s29
      %p38 = scmp.eq.s32.totalorder %s23, 0
      %p39 = por %p37, %p38
      %p40 = scmp.ne.s32.totalorder %s28, %s29
      %p41 = scmp.eq.s32.totalorder %s24, 3
      %p42 = por %p40, %p41
      %p44 = scmp.ne.s32.totalorder %s29, %s43
      %p45 = scmp.eq.s32.totalorder %s24, 0
      %p46 = por %p44, %p45
      %s47 = ssub.s32 %s18, %s25
      %p48 = scmp.eq.s32.totalorder %s47, 0
      %s50 = sadd.s32 %s49, 1
      %s51 = scalar_select %p48, %s49, %s50
      %p54 = pneg %p48
      %p55 = scmp.eq.s32.totalorder %s18, 3
      %p56 = por %p54, %p55
      %p57 = scmp.ne.s32.totalorder %s49, %s52
      %p58 = scmp.eq.s32.totalorder %s18, 0
      %p59 = por %p57, %p58
      %p60 = scmp.ne.s32.totalorder %s49, %s52
      %p61 = scmp.eq.s32.totalorder %s23, 3
      %p62 = por %p60, %p61
      %p63 = scmp.ne.s32.totalorder %s52, %s53
      %p64 = scmp.eq.s32.totalorder %s23, 0
      %p65 = por %p63, %p64
      %p66 = scmp.ne.s32.totalorder %s52, %s53
      %p67 = scmp.eq.s32.totalorder %s24, 3
      %p68 = por %p66, %p67
      %p70 = scmp.ne.s32.totalorder %s53, %s69
      %p71 = scmp.eq.s32.totalorder %s24, 0
      %p72 = por %p70, %p71
      %s73 = ssub.s32 %s18, %s25
      %p74 = scmp.eq.s32.totalorder %s73, 0
      %s76 = sadd.s32 %s75, 1
      %s77 = scalar_select %p74, %s75, %s76
      %p80 = pneg %p74
      %p81 = scmp.eq.s32.totalorder %s18, 3
      %p82 = por %p80, %p81
      %p83 = scmp.ne.s32.totalorder %s75, %s78
      %p84 = scmp.eq.s32.totalorder %s18, 0
      %p85 = por %p83, %p84
      %p86 = scmp.ne.s32.totalorder %s75, %s78
      %p87 = scmp.eq.s32.totalorder %s23, 3
      %p88 = por %p86, %p87
      %p89 = scmp.ne.s32.totalorder %s78, %s79
      %p90 = scmp.eq.s32.totalorder %s23, 0
      %p91 = por %p89, %p90
      %p92 = scmp.ne.s32.totalorder %s78, %s79
      %p93 = scmp.eq.s32.totalorder %s24, 3
      %p94 = por %p92, %p93
      %p96 = scmp.ne.s32.totalorder %s79, %s95
      %p97 = scmp.eq.s32.totalorder %s24, 0
      %p98 = por %p96, %p97
      %s99 = ssub.s32 %s18, %s25
      %p100 = scmp.eq.s32.totalorder %s99, 0
      %s102 = sadd.s32 %s101, 1
      %s103 = scalar_select %p100, %s101, %s102
      %p106 = pneg %p100
      %p107 = scmp.eq.s32.totalorder %s18, 3
      %p108 = por %p106, %p107
      %p109 = scmp.ne.s32.totalorder %s101, %s104
      %p110 = scmp.eq.s32.totalorder %s18, 0
      %p111 = por %p109, %p110
      %p112 = scmp.ne.s32.totalorder %s101, %s104
      %p113 = scmp.eq.s32.totalorder %s23, 3
      %p114 = por %p112, %p113
      %p115 = scmp.ne.s32.totalorder %s104, %s105
      %p116 = scmp.eq.s32.totalorder %s23, 0
      %p117 = por %p115, %p116
      %p118 = scmp.ne.s32.totalorder %s104, %s105
      %p119 = scmp.eq.s32.totalorder %s24, 3
      %p120 = por %p118, %p119
      %p122 = scmp.ne.s32.totalorder %s105, %s121
      %p123 = scmp.eq.s32.totalorder %s24, 0
      %p124 = por %p122, %p123
      %p125 = scmp.le.s32.totalorder 1, %s18
      %p126 = scmp.lt.s32.totalorder %s18, 5
      %p127 = pnand %p125, %p126
      %p128 = pneg %p127
      // Predicated region
      $region9: #{linear_fcq_net_forward.1} parent=5 // pred_check
        _
      $region10: #{linear_fcq_net_forward.1} parent=5 // pred_check_branch
        %130 = sbr.rel (%p127) target = $region12
      $region11: #{linear_fcq_net_forward.1} parent=5 // pred_region
        %s131 = ssub.s32 %s18, 1
        // Predicated region
        $region13: #{linear_fcq_net_forward.1} parent=11 // pred_check
          %p132 = pneg %p39
        $region14: #{linear_fcq_net_forward.1} parent=11 // pred_check_branch
          %134 = sbr.rel (%p132) target = $region16
        $region15: #{linear_fcq_net_forward.1} parent=11 // pred_region
          _
        $region16: #{linear_fcq_net_forward.1} parent=11 // pred_fallthru
          _
      $region12: #{linear_fcq_net_forward.1} parent=5 // pred_fallthru
        _
      %p135 = scmp.lt.s32.totalorder %s18, 4
      // Predicated region
      $region17: #{linear_fcq_net_forward.1} parent=5 // pred_check
        %p136 = pneg %p135
      $region18: #{linear_fcq_net_forward.1} parent=5 // pred_check_branch
        %138 = sbr.rel (%p136) target = $region20
      $region19: #{linear_fcq_net_forward.1} parent=5 // pred_region
        // Predicated region
        $region21: #{linear_fcq_net_forward.1} parent=19 // pred_check
          %p139 = pneg %p59
        $region22: #{linear_fcq_net_forward.1} parent=19 // pred_check_branch
          %141 = sbr.rel (%p139) target = $region24
        $region23: #{linear_fcq_net_forward.1} parent=19 // pred_region
          %s142 = sand.u32 %s49, 1
          %s143 = scalar_lea.sflag [#allocation3], %s142
          %s144 = sand.u32 %s49, 1
          %s145 = smul.addr %s144, 2048
          %s146 = scalar_lea.vmem [#allocation2], %s145
          %s147 = smul.u32 8, %s18
          %149 = vsyncadd %s143, 0
          %s150 = smul.addr %s147, 4
          %s151 = scalar_lea.hbm %s1, %s150
          %s152 = sshll.u32 %s151, 4
          %s153 = int_to_ptr.hbm [resolvable:$true] %s152
          %s154 = sshll.u32 %s146, 4
          %s155 = int_to_ptr.vmem [resolvable:$true] %s154
          %160 = dma.hbm_to_vmem [thread:$0]  %s153, 32768, %s155, %s143, 2048, 512, 32
        $region24: #{linear_fcq_net_forward.1} parent=19 // pred_fallthru
          _
        // Predicated region
        $region25: #{linear_fcq_net_forward.1} parent=19 // pred_check
          %p161 = pneg %p85
        $region26: #{linear_fcq_net_forward.1} parent=19 // pred_check_branch
          %163 = sbr.rel (%p161) target = $region28
        $region27: #{linear_fcq_net_forward.1} parent=19 // pred_region
          %s164 = sand.u32 %s75, 1
          %s165 = scalar_lea.sflag [#allocation6], %s164
          %s166 = sand.u32 %s75, 1
          %s167 = smul.addr %s166, 8
          %s168 = scalar_lea.vmem [#allocation5], %s167
          %s169 = smul.u32 8, %s18
          %171 = vsyncadd %s165, 0
          %s172 = scalar_lea.hbm %s2, %s169
          %s174 = sshll.u32 %s172, 4
          %s175 = int_to_ptr.hbm [resolvable:$true] %s174
          %s176 = sshll.u32 %s168, 4
          %s177 = int_to_ptr.vmem [resolvable:$true] %s176
          %179 = dma.hbm_to_vmem [thread:$0]  %s175, 128, %s177, %s165
        $region28: #{linear_fcq_net_forward.1} parent=19 // pred_fallthru
          _
      $region20: #{linear_fcq_net_forward.1} parent=5 // pred_fallthru
        _
      %p180 = scmp.le.s32.totalorder 1, %s18
      %p181 = scmp.lt.s32.totalorder %s18, 5
      %p182 = pnand %p180, %p181
      %p183 = pneg %p182
      // Predicated region
      $region29: #{linear_fcq_net_forward.1} parent=5 // pred_check
        _
      $region30: #{linear_fcq_net_forward.1} parent=5 // pred_check_branch
        %185 = sbr.rel (%p182) target = $region32
      $region31: #{linear_fcq_net_forward.1} parent=5 // pred_region
        %s186 = ssub.s32 %s18, 1
        %s187 = sand.u32 %s52, 1
        %s188 = scalar_lea.sflag [#allocation3], %s187
        %s189 = sand.u32 %s52, 1
        %s190 = smul.addr %s189, 2048
        %s191 = scalar_lea.vmem [#allocation2], %s190
        // Predicated region
        $region33: #{linear_fcq_net_forward.1} parent=31 // pred_check
          %p192 = pneg %p65
        $region34: #{linear_fcq_net_forward.1} parent=31 // pred_check_branch
          %194 = sbr.rel (%p192) target = $region36
        $region35: #{linear_fcq_net_forward.1} parent=31 // pred_region
          %196 = dma.done %s188, 32768
        $region36: #{linear_fcq_net_forward.1} parent=31 // pred_fallthru
          _
        %s197 = sand.u32 %s78, 1
        %s198 = scalar_lea.sflag [#allocation6], %s197
        %s199 = sand.u32 %s78, 1
        %s200 = smul.addr %s199, 8
        %s201 = scalar_lea.vmem [#allocation5], %s200
        // Predicated region
        $region37: #{linear_fcq_net_forward.1} parent=31 // pred_check
          %p202 = pneg %p91
        $region38: #{linear_fcq_net_forward.1} parent=31 // pred_check_branch
          %204 = sbr.rel (%p202) target = $region40
        $region39: #{linear_fcq_net_forward.1} parent=31 // pred_region
          %206 = dma.done %s198, 128
        $region40: #{linear_fcq_net_forward.1} parent=31 // pred_fallthru
          _
        %p207 = pneg %p39
        %p208 = pneg %p36
        %s209 = sand.u32 %s52, 1
        %s210 = scalar_lea.sflag [#allocation3], %s209
        %s211 = sand.u32 %s52, 1
        %s212 = smul.addr %s211, 2048
        %s213 = scalar_lea.vmem [#allocation2], %s212
        %p214 = pneg %p65
        %p215 = pneg %p62
        %s216 = sand.u32 %s78, 1
        %s217 = scalar_lea.sflag [#allocation6], %s216
        %s218 = sand.u32 %s78, 1
        %s219 = smul.addr %s218, 8
        %s220 = scalar_lea.vmem [#allocation5], %s219
        %p221 = pneg %p91
        %p222 = pneg %p88
        %p223 = pneg %p117
        %p224 = pneg %p114
        %s225 = sand.u32 %s104, 1
        %s226 = scalar_lea.sflag [#allocation4], %s225
        %s227 = sand.u32 %s104, 1
        %s228 = smul.addr %s227, 16
        %s229 = scalar_lea.vmem [#allocation7], %s228
        %s230 = smul.u32 8, %s23
        %s231 = smul.u32 8, %s23
        %s232 = smul.u32 8, %s23
        %v233 = vld [vmem:[%s0] sm:$0xff]
        %235 = vst [vmem:[#allocation1] ss:$4 sm:$0xff] %v233
        %v236 = vld.sshfl [vmem:[#allocation1] sm:$0xff pattern:$0x73625140]
        %v237 = vld.sshfl [vmem:[#allocation1 + $0x8] sm:$0xff pattern:$0x73625140]
        %v238 = vld.sshfl [vmem:[#allocation1 + $0x10] sm:$0xff pattern:$0x73625140]
        %v239 = vld.sshfl [vmem:[#allocation1 + $0x18] sm:$0xff pattern:$0x73625140]
        %v244 = vpack.c.bf16 %v236, %v236
        %v245 = vpack.c.bf16 %v237, %v237
        %v246 = vpack.c.bf16 %v238, %v238
        %v247 = vpack.c.bf16 %v239, %v239
        %v248 = vld [vmem:[%s191] sm:$0xff]
        %v249 = vld [vmem:[%s191 + $0x8] sm:$0xff]
        %v250 = vld [vmem:[%s191 + $0x10] sm:$0xff]
        %v251 = vld [vmem:[%s191 + $0x18] sm:$0xff]
        %v252 = vld [vmem:[%s191 + $0x20] sm:$0xff]
        %v253 = vld [vmem:[%s191 + $0x28] sm:$0xff]
        %v254 = vld [vmem:[%s191 + $0x30] sm:$0xff]
        %v255 = vld [vmem:[%s191 + $0x38] sm:$0xff]
        %v256 = vld [vmem:[%s191 + $0x40] sm:$0xff]
        %v257 = vld [vmem:[%s191 + $0x48] sm:$0xff]
        %v258 = vld [vmem:[%s191 + $0x50] sm:$0xff]
        %v259 = vld [vmem:[%s191 + $0x58] sm:$0xff]
        %v260 = vld [vmem:[%s191 + $0x60] sm:$0xff]
        %v261 = vld [vmem:[%s191 + $0x68] sm:$0xff]
        %v262 = vld [vmem:[%s191 + $0x70] sm:$0xff]
        %v263 = vld [vmem:[%s191 + $0x78] sm:$0xff]
        %v264 = vld [vmem:[%s191 + $0x80] sm:$0xff]
        %v265 = vld [vmem:[%s191 + $0x88] sm:$0xff]
        %v266 = vld [vmem:[%s191 + $0x90] sm:$0xff]
        %v267 = vld [vmem:[%s191 + $0x98] sm:$0xff]
        %v268 = vld [vmem:[%s191 + $0xa0] sm:$0xff]
        %v269 = vld [vmem:[%s191 + $0xa8] sm:$0xff]
        %v270 = vld [vmem:[%s191 + $0xb0] sm:$0xff]
        %v271 = vld [vmem:[%s191 + $0xb8] sm:$0xff]
        %v272 = vld [vmem:[%s191 + $0xc0] sm:$0xff]
        %v273 = vld [vmem:[%s191 + $0xc8] sm:$0xff]
        %v274 = vld [vmem:[%s191 + $0xd0] sm:$0xff]
        %v275 = vld [vmem:[%s191 + $0xd8] sm:$0xff]
        %v276 = vld [vmem:[%s191 + $0xe0] sm:$0xff]
        %v277 = vld [vmem:[%s191 + $0xe8] sm:$0xff]
        %v278 = vld [vmem:[%s191 + $0xf0] sm:$0xff]
        %v279 = vld [vmem:[%s191 + $0xf8] sm:$0xff]
        %v280 = vld [vmem:[%s191 + $0x100] sm:$0xff]
        %v281 = vld [vmem:[%s191 + $0x108] sm:$0xff]
        %v282 = vld [vmem:[%s191 + $0x110] sm:$0xff]
        %v283 = vld [vmem:[%s191 + $0x118] sm:$0xff]
        %v284 = vld [vmem:[%s191 + $0x120] sm:$0xff]
        %v285 = vld [vmem:[%s191 + $0x128] sm:$0xff]
        %v286 = vld [vmem:[%s191 + $0x130] sm:$0xff]
        %v287 = vld [vmem:[%s191 + $0x138] sm:$0xff]
        %v288 = vld [vmem:[%s191 + $0x140] sm:$0xff]
        %v289 = vld [vmem:[%s191 + $0x148] sm:$0xff]
        %v290 = vld [vmem:[%s191 + $0x150] sm:$0xff]
        %v291 = vld [vmem:[%s191 + $0x158] sm:$0xff]
        %v292 = vld [vmem:[%s191 + $0x160] sm:$0xff]
        %v293 = vld [vmem:[%s191 + $0x168] sm:$0xff]
        %v294 = vld [vmem:[%s191 + $0x170] sm:$0xff]
        %v295 = vld [vmem:[%s191 + $0x178] sm:$0xff]
        %v296 = vld [vmem:[%s191 + $0x180] sm:$0xff]
        %v297 = vld [vmem:[%s191 + $0x188] sm:$0xff]
        %v298 = vld [vmem:[%s191 + $0x190] sm:$0xff]
        %v299 = vld [vmem:[%s191 + $0x198] sm:$0xff]
        %v300 = vld [vmem:[%s191 + $0x1a0] sm:$0xff]
        %v301 = vld [vmem:[%s191 + $0x1a8] sm:$0xff]
        %v302 = vld [vmem:[%s191 + $0x1b0] sm:$0xff]
        %v303 = vld [vmem:[%s191 + $0x1b8] sm:$0xff]
        %v304 = vld [vmem:[%s191 + $0x1c0] sm:$0xff]
        %v305 = vld [vmem:[%s191 + $0x1c8] sm:$0xff]
        %v306 = vld [vmem:[%s191 + $0x1d0] sm:$0xff]
        %v307 = vld [vmem:[%s191 + $0x1d8] sm:$0xff]
        %v308 = vld [vmem:[%s191 + $0x1e0] sm:$0xff]
        %v309 = vld [vmem:[%s191 + $0x1e8] sm:$0xff]
        %v310 = vld [vmem:[%s191 + $0x1f0] sm:$0xff]
        %v311 = vld [vmem:[%s191 + $0x1f8] sm:$0xff]
        %v312 = vld [vmem:[%s191 + $0x200] sm:$0xff]
        %v313 = vld [vmem:[%s191 + $0x208] sm:$0xff]
        %v314 = vld [vmem:[%s191 + $0x210] sm:$0xff]
        %v315 = vld [vmem:[%s191 + $0x218] sm:$0xff]
        %v316 = vld [vmem:[%s191 + $0x220] sm:$0xff]
        %v317 = vld [vmem:[%s191 + $0x228] sm:$0xff]
        %v318 = vld [vmem:[%s191 + $0x230] sm:$0xff]
        %v319 = vld [vmem:[%s191 + $0x238] sm:$0xff]
        %v320 = vld [vmem:[%s191 + $0x240] sm:$0xff]
        %v321 = vld [vmem:[%s191 + $0x248] sm:$0xff]
        %v322 = vld [vmem:[%s191 + $0x250] sm:$0xff]
        %v323 = vld [vmem:[%s191 + $0x258] sm:$0xff]
        %v324 = vld [vmem:[%s191 + $0x260] sm:$0xff]
        %v325 = vld [vmem:[%s191 + $0x268] sm:$0xff]
        %v326 = vld [vmem:[%s191 + $0x270] sm:$0xff]
        %v327 = vld [vmem:[%s191 + $0x278] sm:$0xff]
        %v328 = vld [vmem:[%s191 + $0x280] sm:$0xff]
        %v329 = vld [vmem:[%s191 + $0x288] sm:$0xff]
        %v330 = vld [vmem:[%s191 + $0x290] sm:$0xff]
        %v331 = vld [vmem:[%s191 + $0x298] sm:$0xff]
        %v332 = vld [vmem:[%s191 + $0x2a0] sm:$0xff]
        %v333 = vld [vmem:[%s191 + $0x2a8] sm:$0xff]
        %v334 = vld [vmem:[%s191 + $0x2b0] sm:$0xff]
        %v335 = vld [vmem:[%s191 + $0x2b8] sm:$0xff]
        %v336 = vld [vmem:[%s191 + $0x2c0] sm:$0xff]
        %v337 = vld [vmem:[%s191 + $0x2c8] sm:$0xff]
        %v338 = vld [vmem:[%s191 + $0x2d0] sm:$0xff]
        %v339 = vld [vmem:[%s191 + $0x2d8] sm:$0xff]
        %v340 = vld [vmem:[%s191 + $0x2e0] sm:$0xff]
        %v341 = vld [vmem:[%s191 + $0x2e8] sm:$0xff]
        %v342 = vld [vmem:[%s191 + $0x2f0] sm:$0xff]
        %v343 = vld [vmem:[%s191 + $0x2f8] sm:$0xff]
        %v344 = vld [vmem:[%s191 + $0x300] sm:$0xff]
        %v345 = vld [vmem:[%s191 + $0x308] sm:$0xff]
        %v346 = vld [vmem:[%s191 + $0x310] sm:$0xff]
        %v347 = vld [vmem:[%s191 + $0x318] sm:$0xff]
        %v348 = vld [vmem:[%s191 + $0x320] sm:$0xff]
        %v349 = vld [vmem:[%s191 + $0x328] sm:$0xff]
        %v350 = vld [vmem:[%s191 + $0x330] sm:$0xff]
        %v351 = vld [vmem:[%s191 + $0x338] sm:$0xff]
        %v352 = vld [vmem:[%s191 + $0x340] sm:$0xff]
        %v353 = vld [vmem:[%s191 + $0x348] sm:$0xff]
        %v354 = vld [vmem:[%s191 + $0x350] sm:$0xff]
        %v355 = vld [vmem:[%s191 + $0x358] sm:$0xff]
        %v356 = vld [vmem:[%s191 + $0x360] sm:$0xff]
        %v357 = vld [vmem:[%s191 + $0x368] sm:$0xff]
        %v358 = vld [vmem:[%s191 + $0x370] sm:$0xff]
        %v359 = vld [vmem:[%s191 + $0x378] sm:$0xff]
        %v360 = vld [vmem:[%s191 + $0x380] sm:$0xff]
        %v361 = vld [vmem:[%s191 + $0x388] sm:$0xff]
        %v362 = vld [vmem:[%s191 + $0x390] sm:$0xff]
        %v363 = vld [vmem:[%s191 + $0x398] sm:$0xff]
        %v364 = vld [vmem:[%s191 + $0x3a0] sm:$0xff]
        %v365 = vld [vmem:[%s191 + $0x3a8] sm:$0xff]
        %v366 = vld [vmem:[%s191 + $0x3b0] sm:$0xff]
        %v367 = vld [vmem:[%s191 + $0x3b8] sm:$0xff]
        %v368 = vld [vmem:[%s191 + $0x3c0] sm:$0xff]
        %v369 = vld [vmem:[%s191 + $0x3c8] sm:$0xff]
        %v370 = vld [vmem:[%s191 + $0x3d0] sm:$0xff]
        %v371 = vld [vmem:[%s191 + $0x3d8] sm:$0xff]
        %v372 = vld [vmem:[%s191 + $0x3e0] sm:$0xff]
        %v373 = vld [vmem:[%s191 + $0x3e8] sm:$0xff]
        %v374 = vld [vmem:[%s191 + $0x3f0] sm:$0xff]
        %v375 = vld [vmem:[%s191 + $0x3f8] sm:$0xff]
        %v376 = vld [vmem:[%s191 + $0x400] sm:$0xff]
        %v377 = vld [vmem:[%s191 + $0x408] sm:$0xff]
        %v378 = vld [vmem:[%s191 + $0x410] sm:$0xff]
        %v379 = vld [vmem:[%s191 + $0x418] sm:$0xff]
        %v380 = vld [vmem:[%s191 + $0x420] sm:$0xff]
        %v381 = vld [vmem:[%s191 + $0x428] sm:$0xff]
        %v382 = vld [vmem:[%s191 + $0x430] sm:$0xff]
        %v383 = vld [vmem:[%s191 + $0x438] sm:$0xff]
        %v384 = vld [vmem:[%s191 + $0x440] sm:$0xff]
        %v385 = vld [vmem:[%s191 + $0x448] sm:$0xff]
        %v386 = vld [vmem:[%s191 + $0x450] sm:$0xff]
        %v387 = vld [vmem:[%s191 + $0x458] sm:$0xff]
        %v388 = vld [vmem:[%s191 + $0x460] sm:$0xff]
        %v389 = vld [vmem:[%s191 + $0x468] sm:$0xff]
        %v390 = vld [vmem:[%s191 + $0x470] sm:$0xff]
        %v391 = vld [vmem:[%s191 + $0x478] sm:$0xff]
        %v392 = vld [vmem:[%s191 + $0x480] sm:$0xff]
        %v393 = vld [vmem:[%s191 + $0x488] sm:$0xff]
        %v394 = vld [vmem:[%s191 + $0x490] sm:$0xff]
        %v395 = vld [vmem:[%s191 + $0x498] sm:$0xff]
        %v396 = vld [vmem:[%s191 + $0x4a0] sm:$0xff]
        %v397 = vld [vmem:[%s191 + $0x4a8] sm:$0xff]
        %v398 = vld [vmem:[%s191 + $0x4b0] sm:$0xff]
        %v399 = vld [vmem:[%s191 + $0x4b8] sm:$0xff]
        %v400 = vld [vmem:[%s191 + $0x4c0] sm:$0xff]
        %v401 = vld [vmem:[%s191 + $0x4c8] sm:$0xff]
        %v402 = vld [vmem:[%s191 + $0x4d0] sm:$0xff]
        %v403 = vld [vmem:[%s191 + $0x4d8] sm:$0xff]
        %v404 = vld [vmem:[%s191 + $0x4e0] sm:$0xff]
        %v405 = vld [vmem:[%s191 + $0x4e8] sm:$0xff]
        %v406 = vld [vmem:[%s191 + $0x4f0] sm:$0xff]
        %v407 = vld [vmem:[%s191 + $0x4f8] sm:$0xff]
        %v408 = vld [vmem:[%s191 + $0x500] sm:$0xff]
        %v409 = vld [vmem:[%s191 + $0x508] sm:$0xff]
        %v410 = vld [vmem:[%s191 + $0x510] sm:$0xff]
        %v411 = vld [vmem:[%s191 + $0x518] sm:$0xff]
        %v412 = vld [vmem:[%s191 + $0x520] sm:$0xff]
        %v413 = vld [vmem:[%s191 + $0x528] sm:$0xff]
        %v414 = vld [vmem:[%s191 + $0x530] sm:$0xff]
        %v415 = vld [vmem:[%s191 + $0x538] sm:$0xff]
        %v416 = vld [vmem:[%s191 + $0x540] sm:$0xff]
        %v417 = vld [vmem:[%s191 + $0x548] sm:$0xff]
        %v418 = vld [vmem:[%s191 + $0x550] sm:$0xff]
        %v419 = vld [vmem:[%s191 + $0x558] sm:$0xff]
        %v420 = vld [vmem:[%s191 + $0x560] sm:$0xff]
        %v421 = vld [vmem:[%s191 + $0x568] sm:$0xff]
        %v422 = vld [vmem:[%s191 + $0x570] sm:$0xff]
        %v423 = vld [vmem:[%s191 + $0x578] sm:$0xff]
        %v424 = vld [vmem:[%s191 + $0x580] sm:$0xff]
        %v425 = vld [vmem:[%s191 + $0x588] sm:$0xff]
        %v426 = vld [vmem:[%s191 + $0x590] sm:$0xff]
        %v427 = vld [vmem:[%s191 + $0x598] sm:$0xff]
        %v428 = vld [vmem:[%s191 + $0x5a0] sm:$0xff]
        %v429 = vld [vmem:[%s191 + $0x5a8] sm:$0xff]
        %v430 = vld [vmem:[%s191 + $0x5b0] sm:$0xff]
        %v431 = vld [vmem:[%s191 + $0x5b8] sm:$0xff]
        %v432 = vld [vmem:[%s191 + $0x5c0] sm:$0xff]
        %v433 = vld [vmem:[%s191 + $0x5c8] sm:$0xff]
        %v434 = vld [vmem:[%s191 + $0x5d0] sm:$0xff]
        %v435 = vld [vmem:[%s191 + $0x5d8] sm:$0xff]
        %v436 = vld [vmem:[%s191 + $0x5e0] sm:$0xff]
        %v437 = vld [vmem:[%s191 + $0x5e8] sm:$0xff]
        %v438 = vld [vmem:[%s191 + $0x5f0] sm:$0xff]
        %v439 = vld [vmem:[%s191 + $0x5f8] sm:$0xff]
        %v440 = vld [vmem:[%s191 + $0x600] sm:$0xff]
        %v441 = vld [vmem:[%s191 + $0x608] sm:$0xff]
        %v442 = vld [vmem:[%s191 + $0x610] sm:$0xff]
        %v443 = vld [vmem:[%s191 + $0x618] sm:$0xff]
        %v444 = vld [vmem:[%s191 + $0x620] sm:$0xff]
        %v445 = vld [vmem:[%s191 + $0x628] sm:$0xff]
        %v446 = vld [vmem:[%s191 + $0x630] sm:$0xff]
        %v447 = vld [vmem:[%s191 + $0x638] sm:$0xff]
        %v448 = vld [vmem:[%s191 + $0x640] sm:$0xff]
        %v449 = vld [vmem:[%s191 + $0x648] sm:$0xff]
        %v450 = vld [vmem:[%s191 + $0x650] sm:$0xff]
        %v451 = vld [vmem:[%s191 + $0x658] sm:$0xff]
        %v452 = vld [vmem:[%s191 + $0x660] sm:$0xff]
        %v453 = vld [vmem:[%s191 + $0x668] sm:$0xff]
        %v454 = vld [vmem:[%s191 + $0x670] sm:$0xff]
        %v455 = vld [vmem:[%s191 + $0x678] sm:$0xff]
        %v456 = vld [vmem:[%s191 + $0x680] sm:$0xff]
        %v457 = vld [vmem:[%s191 + $0x688] sm:$0xff]
        %v458 = vld [vmem:[%s191 + $0x690] sm:$0xff]
        %v459 = vld [vmem:[%s191 + $0x698] sm:$0xff]
        %v460 = vld [vmem:[%s191 + $0x6a0] sm:$0xff]
        %v461 = vld [vmem:[%s191 + $0x6a8] sm:$0xff]
        %v462 = vld [vmem:[%s191 + $0x6b0] sm:$0xff]
        %v463 = vld [vmem:[%s191 + $0x6b8] sm:$0xff]
        %v464 = vld [vmem:[%s191 + $0x6c0] sm:$0xff]
        %v465 = vld [vmem:[%s191 + $0x6c8] sm:$0xff]
        %v466 = vld [vmem:[%s191 + $0x6d0] sm:$0xff]
        %v467 = vld [vmem:[%s191 + $0x6d8] sm:$0xff]
        %v468 = vld [vmem:[%s191 + $0x6e0] sm:$0xff]
        %v469 = vld [vmem:[%s191 + $0x6e8] sm:$0xff]
        %v470 = vld [vmem:[%s191 + $0x6f0] sm:$0xff]
        %v471 = vld [vmem:[%s191 + $0x6f8] sm:$0xff]
        %v472 = vld [vmem:[%s191 + $0x700] sm:$0xff]
        %v473 = vld [vmem:[%s191 + $0x708] sm:$0xff]
        %v474 = vld [vmem:[%s191 + $0x710] sm:$0xff]
        %v475 = vld [vmem:[%s191 + $0x718] sm:$0xff]
        %v476 = vld [vmem:[%s191 + $0x720] sm:$0xff]
        %v477 = vld [vmem:[%s191 + $0x728] sm:$0xff]
        %v478 = vld [vmem:[%s191 + $0x730] sm:$0xff]
        %v479 = vld [vmem:[%s191 + $0x738] sm:$0xff]
        %v480 = vld [vmem:[%s191 + $0x740] sm:$0xff]
        %v481 = vld [vmem:[%s191 + $0x748] sm:$0xff]
        %v482 = vld [vmem:[%s191 + $0x750] sm:$0xff]
        %v483 = vld [vmem:[%s191 + $0x758] sm:$0xff]
        %v484 = vld [vmem:[%s191 + $0x760] sm:$0xff]
        %v485 = vld [vmem:[%s191 + $0x768] sm:$0xff]
        %v486 = vld [vmem:[%s191 + $0x770] sm:$0xff]
        %v487 = vld [vmem:[%s191 + $0x778] sm:$0xff]
        %v488 = vld [vmem:[%s191 + $0x780] sm:$0xff]
        %v489 = vld [vmem:[%s191 + $0x788] sm:$0xff]
        %v490 = vld [vmem:[%s191 + $0x790] sm:$0xff]
        %v491 = vld [vmem:[%s191 + $0x798] sm:$0xff]
        %v492 = vld [vmem:[%s191 + $0x7a0] sm:$0xff]
        %v493 = vld [vmem:[%s191 + $0x7a8] sm:$0xff]
        %v494 = vld [vmem:[%s191 + $0x7b0] sm:$0xff]
        %v495 = vld [vmem:[%s191 + $0x7b8] sm:$0xff]
        %v496 = vld [vmem:[%s191 + $0x7c0] sm:$0xff]
        %v497 = vld [vmem:[%s191 + $0x7c8] sm:$0xff]
        %v498 = vld [vmem:[%s191 + $0x7d0] sm:$0xff]
        %v499 = vld [vmem:[%s191 + $0x7d8] sm:$0xff]
        %v500 = vld [vmem:[%s191 + $0x7e0] sm:$0xff]
        %v501 = vld [vmem:[%s191 + $0x7e8] sm:$0xff]
        %v502 = vld [vmem:[%s191 + $0x7f0] sm:$0xff]
        %v503 = vld [vmem:[%s191 + $0x7f8] sm:$0xff]
        %v504 = vld [vmem:[%s201] sm:$0xff]
        %v506 = vperm.slane %v504, 0
        %v507 = vperm.slane %v504, 1
        %v508 = vperm.slane %v504, 2
        %v509 = vperm.slane %v504, 3
        %v510 = vperm.slane %v504, 4
        %v511 = vperm.slane %v504, 5
        %v512 = vperm.slane %v504, 6
        %v513 = vperm.slane %v504, 7
        %v778 = vunpack.c.l.b16 %v248
        %v779 = vunpack.c.h.b16 %v248
        %v780 = vunpack.c.l.b16 %v249
        %v781 = vunpack.c.h.b16 %v249
        %v782 = vunpack.c.l.b16 %v250
        %v783 = vunpack.c.h.b16 %v250
        %v784 = vunpack.c.l.b16 %v251
        %v785 = vunpack.c.h.b16 %v251
        %v786 = vunpack.c.l.b16 %v252
        %v787 = vunpack.c.h.b16 %v252
        %v788 = vunpack.c.l.b16 %v253
        %v789 = vunpack.c.h.b16 %v253
        %v790 = vunpack.c.l.b16 %v254
        %v791 = vunpack.c.h.b16 %v254
        %v792 = vunpack.c.l.b16 %v255
        %v793 = vunpack.c.h.b16 %v255
        %v794 = vunpack.c.l.b16 %v256
        %v795 = vunpack.c.h.b16 %v256
        %v796 = vunpack.c.l.b16 %v257
        %v797 = vunpack.c.h.b16 %v257
        %v798 = vunpack.c.l.b16 %v258
        %v799 = vunpack.c.h.b16 %v258
        %v800 = vunpack.c.l.b16 %v259
        %v801 = vunpack.c.h.b16 %v259
        %v802 = vunpack.c.l.b16 %v260
        %v803 = vunpack.c.h.b16 %v260
        %v804 = vunpack.c.l.b16 %v261
        %v805 = vunpack.c.h.b16 %v261
        %v806 = vunpack.c.l.b16 %v262
        %v807 = vunpack.c.h.b16 %v262
        %v808 = vunpack.c.l.b16 %v263
        %v809 = vunpack.c.h.b16 %v263
        %v810 = vunpack.c.l.b16 %v264
        %v811 = vunpack.c.h.b16 %v264
        %v812 = vunpack.c.l.b16 %v265
        %v813 = vunpack.c.h.b16 %v265
        %v814 = vunpack.c.l.b16 %v266
        %v815 = vunpack.c.h.b16 %v266
        %v816 = vunpack.c.l.b16 %v267
        %v817 = vunpack.c.h.b16 %v267
        %v818 = vunpack.c.l.b16 %v268
        %v819 = vunpack.c.h.b16 %v268
        %v820 = vunpack.c.l.b16 %v269
        %v821 = vunpack.c.h.b16 %v269
        %v822 = vunpack.c.l.b16 %v270
        %v823 = vunpack.c.h.b16 %v270
        %v824 = vunpack.c.l.b16 %v271
        %v825 = vunpack.c.h.b16 %v271
        %v826 = vunpack.c.l.b16 %v272
        %v827 = vunpack.c.h.b16 %v272
        %v828 = vunpack.c.l.b16 %v273
        %v829 = vunpack.c.h.b16 %v273
        %v830 = vunpack.c.l.b16 %v274
        %v831 = vunpack.c.h.b16 %v274
        %v832 = vunpack.c.l.b16 %v275
        %v833 = vunpack.c.h.b16 %v275
        %v834 = vunpack.c.l.b16 %v276
        %v835 = vunpack.c.h.b16 %v276
        %v836 = vunpack.c.l.b16 %v277
        %v837 = vunpack.c.h.b16 %v277
        %v838 = vunpack.c.l.b16 %v278
        %v839 = vunpack.c.h.b16 %v278
        %v840 = vunpack.c.l.b16 %v279
        %v841 = vunpack.c.h.b16 %v279
        %v842 = vunpack.c.l.b16 %v280
        %v843 = vunpack.c.h.b16 %v280
        %v844 = vunpack.c.l.b16 %v281
        %v845 = vunpack.c.h.b16 %v281
        %v846 = vunpack.c.l.b16 %v282
        %v847 = vunpack.c.h.b16 %v282
        %v848 = vunpack.c.l.b16 %v283
        %v849 = vunpack.c.h.b16 %v283
        %v850 = vunpack.c.l.b16 %v284
        %v851 = vunpack.c.h.b16 %v284
        %v852 = vunpack.c.l.b16 %v285
        %v853 = vunpack.c.h.b16 %v285
        %v854 = vunpack.c.l.b16 %v286
        %v855 = vunpack.c.h.b16 %v286
        %v856 = vunpack.c.l.b16 %v287
        %v857 = vunpack.c.h.b16 %v287
        %v858 = vunpack.c.l.b16 %v288
        %v859 = vunpack.c.h.b16 %v288
        %v860 = vunpack.c.l.b16 %v289
        %v861 = vunpack.c.h.b16 %v289
        %v862 = vunpack.c.l.b16 %v290
        %v863 = vunpack.c.h.b16 %v290
        %v864 = vunpack.c.l.b16 %v291
        %v865 = vunpack.c.h.b16 %v291
        %v866 = vunpack.c.l.b16 %v292
        %v867 = vunpack.c.h.b16 %v292
        %v868 = vunpack.c.l.b16 %v293
        %v869 = vunpack.c.h.b16 %v293
        %v870 = vunpack.c.l.b16 %v294
        %v871 = vunpack.c.h.b16 %v294
        %v872 = vunpack.c.l.b16 %v295
        %v873 = vunpack.c.h.b16 %v295
        %v874 = vunpack.c.l.b16 %v296
        %v875 = vunpack.c.h.b16 %v296
        %v876 = vunpack.c.l.b16 %v297
        %v877 = vunpack.c.h.b16 %v297
        %v878 = vunpack.c.l.b16 %v298
        %v879 = vunpack.c.h.b16 %v298
        %v880 = vunpack.c.l.b16 %v299
        %v881 = vunpack.c.h.b16 %v299
        %v882 = vunpack.c.l.b16 %v300
        %v883 = vunpack.c.h.b16 %v300
        %v884 = vunpack.c.l.b16 %v301
        %v885 = vunpack.c.h.b16 %v301
        %v886 = vunpack.c.l.b16 %v302
        %v887 = vunpack.c.h.b16 %v302
        %v888 = vunpack.c.l.b16 %v303
        %v889 = vunpack.c.h.b16 %v303
        %v890 = vunpack.c.l.b16 %v304
        %v891 = vunpack.c.h.b16 %v304
        %v892 = vunpack.c.l.b16 %v305
        %v893 = vunpack.c.h.b16 %v305
        %v894 = vunpack.c.l.b16 %v306
        %v895 = vunpack.c.h.b16 %v306
        %v896 = vunpack.c.l.b16 %v307
        %v897 = vunpack.c.h.b16 %v307
        %v898 = vunpack.c.l.b16 %v308
        %v899 = vunpack.c.h.b16 %v308
        %v900 = vunpack.c.l.b16 %v309
        %v901 = vunpack.c.h.b16 %v309
        %v902 = vunpack.c.l.b16 %v310
        %v903 = vunpack.c.h.b16 %v310
        %v904 = vunpack.c.l.b16 %v311
        %v905 = vunpack.c.h.b16 %v311
        %v906 = vunpack.c.l.b16 %v312
        %v907 = vunpack.c.h.b16 %v312
        %v908 = vunpack.c.l.b16 %v313
        %v909 = vunpack.c.h.b16 %v313
        %v910 = vunpack.c.l.b16 %v314
        %v911 = vunpack.c.h.b16 %v314
        %v912 = vunpack.c.l.b16 %v315
        %v913 = vunpack.c.h.b16 %v315
        %v914 = vunpack.c.l.b16 %v316
        %v915 = vunpack.c.h.b16 %v316
        %v916 = vunpack.c.l.b16 %v317
        %v917 = vunpack.c.h.b16 %v317
        %v918 = vunpack.c.l.b16 %v318
        %v919 = vunpack.c.h.b16 %v318
        %v920 = vunpack.c.l.b16 %v319
        %v921 = vunpack.c.h.b16 %v319
        %v922 = vunpack.c.l.b16 %v320
        %v923 = vunpack.c.h.b16 %v320
        %v924 = vunpack.c.l.b16 %v321
        %v925 = vunpack.c.h.b16 %v321
        %v926 = vunpack.c.l.b16 %v322
        %v927 = vunpack.c.h.b16 %v322
        %v928 = vunpack.c.l.b16 %v323
        %v929 = vunpack.c.h.b16 %v323
        %v930 = vunpack.c.l.b16 %v324
        %v931 = vunpack.c.h.b16 %v324
        %v932 = vunpack.c.l.b16 %v325
        %v933 = vunpack.c.h.b16 %v325
        %v934 = vunpack.c.l.b16 %v326
        %v935 = vunpack.c.h.b16 %v326
        %v936 = vunpack.c.l.b16 %v327
        %v937 = vunpack.c.h.b16 %v327
        %v938 = vunpack.c.l.b16 %v328
        %v939 = vunpack.c.h.b16 %v328
        %v940 = vunpack.c.l.b16 %v329
        %v941 = vunpack.c.h.b16 %v329
        %v942 = vunpack.c.l.b16 %v330
        %v943 = vunpack.c.h.b16 %v330
        %v944 = vunpack.c.l.b16 %v331
        %v945 = vunpack.c.h.b16 %v331
        %v946 = vunpack.c.l.b16 %v332
        %v947 = vunpack.c.h.b16 %v332
        %v948 = vunpack.c.l.b16 %v333
        %v949 = vunpack.c.h.b16 %v333
        %v950 = vunpack.c.l.b16 %v334
        %v951 = vunpack.c.h.b16 %v334
        %v952 = vunpack.c.l.b16 %v335
        %v953 = vunpack.c.h.b16 %v335
        %v954 = vunpack.c.l.b16 %v336
        %v955 = vunpack.c.h.b16 %v336
        %v956 = vunpack.c.l.b16 %v337
        %v957 = vunpack.c.h.b16 %v337
        %v958 = vunpack.c.l.b16 %v338
        %v959 = vunpack.c.h.b16 %v338
        %v960 = vunpack.c.l.b16 %v339
        %v961 = vunpack.c.h.b16 %v339
        %v962 = vunpack.c.l.b16 %v340
        %v963 = vunpack.c.h.b16 %v340
        %v964 = vunpack.c.l.b16 %v341
        %v965 = vunpack.c.h.b16 %v341
        %v966 = vunpack.c.l.b16 %v342
        %v967 = vunpack.c.h.b16 %v342
        %v968 = vunpack.c.l.b16 %v343
        %v969 = vunpack.c.h.b16 %v343
        %v970 = vunpack.c.l.b16 %v344
        %v971 = vunpack.c.h.b16 %v344
        %v972 = vunpack.c.l.b16 %v345
        %v973 = vunpack.c.h.b16 %v345
        %v974 = vunpack.c.l.b16 %v346
        %v975 = vunpack.c.h.b16 %v346
        %v976 = vunpack.c.l.b16 %v347
        %v977 = vunpack.c.h.b16 %v347
        %v978 = vunpack.c.l.b16 %v348
        %v979 = vunpack.c.h.b16 %v348
        %v980 = vunpack.c.l.b16 %v349
        %v981 = vunpack.c.h.b16 %v349
        %v982 = vunpack.c.l.b16 %v350
        %v983 = vunpack.c.h.b16 %v350
        %v984 = vunpack.c.l.b16 %v351
        %v985 = vunpack.c.h.b16 %v351
        %v986 = vunpack.c.l.b16 %v352
        %v987 = vunpack.c.h.b16 %v352
        %v988 = vunpack.c.l.b16 %v353
        %v989 = vunpack.c.h.b16 %v353
        %v990 = vunpack.c.l.b16 %v354
        %v991 = vunpack.c.h.b16 %v354
        %v992 = vunpack.c.l.b16 %v355
        %v993 = vunpack.c.h.b16 %v355
        %v994 = vunpack.c.l.b16 %v356
        %v995 = vunpack.c.h.b16 %v356
        %v996 = vunpack.c.l.b16 %v357
        %v997 = vunpack.c.h.b16 %v357
        %v998 = vunpack.c.l.b16 %v358
        %v999 = vunpack.c.h.b16 %v358
        %v1000 = vunpack.c.l.b16 %v359
        %v1001 = vunpack.c.h.b16 %v359
        %v1002 = vunpack.c.l.b16 %v360
        %v1003 = vunpack.c.h.b16 %v360
        %v1004 = vunpack.c.l.b16 %v361
        %v1005 = vunpack.c.h.b16 %v361
        %v1006 = vunpack.c.l.b16 %v362
        %v1007 = vunpack.c.h.b16 %v362
        %v1008 = vunpack.c.l.b16 %v363
        %v1009 = vunpack.c.h.b16 %v363
        %v1010 = vunpack.c.l.b16 %v364
        %v1011 = vunpack.c.h.b16 %v364
        %v1012 = vunpack.c.l.b16 %v365
        %v1013 = vunpack.c.h.b16 %v365
        %v1014 = vunpack.c.l.b16 %v366
        %v1015 = vunpack.c.h.b16 %v366
        %v1016 = vunpack.c.l.b16 %v367
        %v1017 = vunpack.c.h.b16 %v367
        %v1018 = vunpack.c.l.b16 %v368
        %v1019 = vunpack.c.h.b16 %v368
        %v1020 = vunpack.c.l.b16 %v369
        %v1021 = vunpack.c.h.b16 %v369
        %v1022 = vunpack.c.l.b16 %v370
        %v1023 = vunpack.c.h.b16 %v370
        %v1024 = vunpack.c.l.b16 %v371
        %v1025 = vunpack.c.h.b16 %v371
        %v1026 = vunpack.c.l.b16 %v372
        %v1027 = vunpack.c.h.b16 %v372
        %v1028 = vunpack.c.l.b16 %v373
        %v1029 = vunpack.c.h.b16 %v373
        %v1030 = vunpack.c.l.b16 %v374
        %v1031 = vunpack.c.h.b16 %v374
        %v1032 = vunpack.c.l.b16 %v375
        %v1033 = vunpack.c.h.b16 %v375
        %v1034 = vunpack.c.l.b16 %v376
        %v1035 = vunpack.c.h.b16 %v376
        %v1036 = vunpack.c.l.b16 %v377
        %v1037 = vunpack.c.h.b16 %v377
        %v1038 = vunpack.c.l.b16 %v378
        %v1039 = vunpack.c.h.b16 %v378
        %v1040 = vunpack.c.l.b16 %v379
        %v1041 = vunpack.c.h.b16 %v379
        %v1042 = vunpack.c.l.b16 %v380
        %v1043 = vunpack.c.h.b16 %v380
        %v1044 = vunpack.c.l.b16 %v381
        %v1045 = vunpack.c.h.b16 %v381
        %v1046 = vunpack.c.l.b16 %v382
        %v1047 = vunpack.c.h.b16 %v382
        %v1048 = vunpack.c.l.b16 %v383
        %v1049 = vunpack.c.h.b16 %v383
        %v1050 = vunpack.c.l.b16 %v384
        %v1051 = vunpack.c.h.b16 %v384
        %v1052 = vunpack.c.l.b16 %v385
        %v1053 = vunpack.c.h.b16 %v385
        %v1054 = vunpack.c.l.b16 %v386
        %v1055 = vunpack.c.h.b16 %v386
        %v1056 = vunpack.c.l.b16 %v387
        %v1057 = vunpack.c.h.b16 %v387
        %v1058 = vunpack.c.l.b16 %v388
        %v1059 = vunpack.c.h.b16 %v388
        %v1060 = vunpack.c.l.b16 %v389
        %v1061 = vunpack.c.h.b16 %v389
        %v1062 = vunpack.c.l.b16 %v390
        %v1063 = vunpack.c.h.b16 %v390
        %v1064 = vunpack.c.l.b16 %v391
        %v1065 = vunpack.c.h.b16 %v391
        %v1066 = vunpack.c.l.b16 %v392
        %v1067 = vunpack.c.h.b16 %v392
        %v1068 = vunpack.c.l.b16 %v393
        %v1069 = vunpack.c.h.b16 %v393
        %v1070 = vunpack.c.l.b16 %v394
        %v1071 = vunpack.c.h.b16 %v394
        %v1072 = vunpack.c.l.b16 %v395
        %v1073 = vunpack.c.h.b16 %v395
        %v1074 = vunpack.c.l.b16 %v396
        %v1075 = vunpack.c.h.b16 %v396
        %v1076 = vunpack.c.l.b16 %v397
        %v1077 = vunpack.c.h.b16 %v397
        %v1078 = vunpack.c.l.b16 %v398
        %v1079 = vunpack.c.h.b16 %v398
        %v1080 = vunpack.c.l.b16 %v399
        %v1081 = vunpack.c.h.b16 %v399
        %v1082 = vunpack.c.l.b16 %v400
        %v1083 = vunpack.c.h.b16 %v400
        %v1084 = vunpack.c.l.b16 %v401
        %v1085 = vunpack.c.h.b16 %v401
        %v1086 = vunpack.c.l.b16 %v402
        %v1087 = vunpack.c.h.b16 %v402
        %v1088 = vunpack.c.l.b16 %v403
        %v1089 = vunpack.c.h.b16 %v403
        %v1090 = vunpack.c.l.b16 %v404
        %v1091 = vunpack.c.h.b16 %v404
        %v1092 = vunpack.c.l.b16 %v405
        %v1093 = vunpack.c.h.b16 %v405
        %v1094 = vunpack.c.l.b16 %v406
        %v1095 = vunpack.c.h.b16 %v406
        %v1096 = vunpack.c.l.b16 %v407
        %v1097 = vunpack.c.h.b16 %v407
        %v1098 = vunpack.c.l.b16 %v408
        %v1099 = vunpack.c.h.b16 %v408
        %v1100 = vunpack.c.l.b16 %v409
        %v1101 = vunpack.c.h.b16 %v409
        %v1102 = vunpack.c.l.b16 %v410
        %v1103 = vunpack.c.h.b16 %v410
        %v1104 = vunpack.c.l.b16 %v411
        %v1105 = vunpack.c.h.b16 %v411
        %v1106 = vunpack.c.l.b16 %v412
        %v1107 = vunpack.c.h.b16 %v412
        %v1108 = vunpack.c.l.b16 %v413
        %v1109 = vunpack.c.h.b16 %v413
        %v1110 = vunpack.c.l.b16 %v414
        %v1111 = vunpack.c.h.b16 %v414
        %v1112 = vunpack.c.l.b16 %v415
        %v1113 = vunpack.c.h.b16 %v415
        %v1114 = vunpack.c.l.b16 %v416
        %v1115 = vunpack.c.h.b16 %v416
        %v1116 = vunpack.c.l.b16 %v417
        %v1117 = vunpack.c.h.b16 %v417
        %v1118 = vunpack.c.l.b16 %v418
        %v1119 = vunpack.c.h.b16 %v418
        %v1120 = vunpack.c.l.b16 %v419
        %v1121 = vunpack.c.h.b16 %v419
        %v1122 = vunpack.c.l.b16 %v420
        %v1123 = vunpack.c.h.b16 %v420
        %v1124 = vunpack.c.l.b16 %v421
        %v1125 = vunpack.c.h.b16 %v421
        %v1126 = vunpack.c.l.b16 %v422
        %v1127 = vunpack.c.h.b16 %v422
        %v1128 = vunpack.c.l.b16 %v423
        %v1129 = vunpack.c.h.b16 %v423
        %v1130 = vunpack.c.l.b16 %v424
        %v1131 = vunpack.c.h.b16 %v424
        %v1132 = vunpack.c.l.b16 %v425
        %v1133 = vunpack.c.h.b16 %v425
        %v1134 = vunpack.c.l.b16 %v426
        %v1135 = vunpack.c.h.b16 %v426
        %v1136 = vunpack.c.l.b16 %v427
        %v1137 = vunpack.c.h.b16 %v427
        %v1138 = vunpack.c.l.b16 %v428
        %v1139 = vunpack.c.h.b16 %v428
        %v1140 = vunpack.c.l.b16 %v429
        %v1141 = vunpack.c.h.b16 %v429
        %v1142 = vunpack.c.l.b16 %v430
        %v1143 = vunpack.c.h.b16 %v430
        %v1144 = vunpack.c.l.b16 %v431
        %v1145 = vunpack.c.h.b16 %v431
        %v1146 = vunpack.c.l.b16 %v432
        %v1147 = vunpack.c.h.b16 %v432
        %v1148 = vunpack.c.l.b16 %v433
        %v1149 = vunpack.c.h.b16 %v433
        %v1150 = vunpack.c.l.b16 %v434
        %v1151 = vunpack.c.h.b16 %v434
        %v1152 = vunpack.c.l.b16 %v435
        %v1153 = vunpack.c.h.b16 %v435
        %v1154 = vunpack.c.l.b16 %v436
        %v1155 = vunpack.c.h.b16 %v436
        %v1156 = vunpack.c.l.b16 %v437
        %v1157 = vunpack.c.h.b16 %v437
        %v1158 = vunpack.c.l.b16 %v438
        %v1159 = vunpack.c.h.b16 %v438
        %v1160 = vunpack.c.l.b16 %v439
        %v1161 = vunpack.c.h.b16 %v439
        %v1162 = vunpack.c.l.b16 %v440
        %v1163 = vunpack.c.h.b16 %v440
        %v1164 = vunpack.c.l.b16 %v441
        %v1165 = vunpack.c.h.b16 %v441
        %v1166 = vunpack.c.l.b16 %v442
        %v1167 = vunpack.c.h.b16 %v442
        %v1168 = vunpack.c.l.b16 %v443
        %v1169 = vunpack.c.h.b16 %v443
        %v1170 = vunpack.c.l.b16 %v444
        %v1171 = vunpack.c.h.b16 %v444
        %v1172 = vunpack.c.l.b16 %v445
        %v1173 = vunpack.c.h.b16 %v445
        %v1174 = vunpack.c.l.b16 %v446
        %v1175 = vunpack.c.h.b16 %v446
        %v1176 = vunpack.c.l.b16 %v447
        %v1177 = vunpack.c.h.b16 %v447
        %v1178 = vunpack.c.l.b16 %v448
        %v1179 = vunpack.c.h.b16 %v448
        %v1180 = vunpack.c.l.b16 %v449
        %v1181 = vunpack.c.h.b16 %v449
        %v1182 = vunpack.c.l.b16 %v450
        %v1183 = vunpack.c.h.b16 %v450
        %v1184 = vunpack.c.l.b16 %v451
        %v1185 = vunpack.c.h.b16 %v451
        %v1186 = vunpack.c.l.b16 %v452
        %v1187 = vunpack.c.h.b16 %v452
        %v1188 = vunpack.c.l.b16 %v453
        %v1189 = vunpack.c.h.b16 %v453
        %v1190 = vunpack.c.l.b16 %v454
        %v1191 = vunpack.c.h.b16 %v454
        %v1192 = vunpack.c.l.b16 %v455
        %v1193 = vunpack.c.h.b16 %v455
        %v1194 = vunpack.c.l.b16 %v456
        %v1195 = vunpack.c.h.b16 %v456
        %v1196 = vunpack.c.l.b16 %v457
        %v1197 = vunpack.c.h.b16 %v457
        %v1198 = vunpack.c.l.b16 %v458
        %v1199 = vunpack.c.h.b16 %v458
        %v1200 = vunpack.c.l.b16 %v459
        %v1201 = vunpack.c.h.b16 %v459
        %v1202 = vunpack.c.l.b16 %v460
        %v1203 = vunpack.c.h.b16 %v460
        %v1204 = vunpack.c.l.b16 %v461
        %v1205 = vunpack.c.h.b16 %v461
        %v1206 = vunpack.c.l.b16 %v462
        %v1207 = vunpack.c.h.b16 %v462
        %v1208 = vunpack.c.l.b16 %v463
        %v1209 = vunpack.c.h.b16 %v463
        %v1210 = vunpack.c.l.b16 %v464
        %v1211 = vunpack.c.h.b16 %v464
        %v1212 = vunpack.c.l.b16 %v465
        %v1213 = vunpack.c.h.b16 %v465
        %v1214 = vunpack.c.l.b16 %v466
        %v1215 = vunpack.c.h.b16 %v466
        %v1216 = vunpack.c.l.b16 %v467
        %v1217 = vunpack.c.h.b16 %v467
        %v1218 = vunpack.c.l.b16 %v468
        %v1219 = vunpack.c.h.b16 %v468
        %v1220 = vunpack.c.l.b16 %v469
        %v1221 = vunpack.c.h.b16 %v469
        %v1222 = vunpack.c.l.b16 %v470
        %v1223 = vunpack.c.h.b16 %v470
        %v1224 = vunpack.c.l.b16 %v471
        %v1225 = vunpack.c.h.b16 %v471
        %v1226 = vunpack.c.l.b16 %v472
        %v1227 = vunpack.c.h.b16 %v472
        %v1228 = vunpack.c.l.b16 %v473
        %v1229 = vunpack.c.h.b16 %v473
        %v1230 = vunpack.c.l.b16 %v474
        %v1231 = vunpack.c.h.b16 %v474
        %v1232 = vunpack.c.l.b16 %v475
        %v1233 = vunpack.c.h.b16 %v475
        %v1234 = vunpack.c.l.b16 %v476
        %v1235 = vunpack.c.h.b16 %v476
        %v1236 = vunpack.c.l.b16 %v477
        %v1237 = vunpack.c.h.b16 %v477
        %v1238 = vunpack.c.l.b16 %v478
        %v1239 = vunpack.c.h.b16 %v478
        %v1240 = vunpack.c.l.b16 %v479
        %v1241 = vunpack.c.h.b16 %v479
        %v1242 = vunpack.c.l.b16 %v480
        %v1243 = vunpack.c.h.b16 %v480
        %v1244 = vunpack.c.l.b16 %v481
        %v1245 = vunpack.c.h.b16 %v481
        %v1246 = vunpack.c.l.b16 %v482
        %v1247 = vunpack.c.h.b16 %v482
        %v1248 = vunpack.c.l.b16 %v483
        %v1249 = vunpack.c.h.b16 %v483
        %v1250 = vunpack.c.l.b16 %v484
        %v1251 = vunpack.c.h.b16 %v484
        %v1252 = vunpack.c.l.b16 %v485
        %v1253 = vunpack.c.h.b16 %v485
        %v1254 = vunpack.c.l.b16 %v486
        %v1255 = vunpack.c.h.b16 %v486
        %v1256 = vunpack.c.l.b16 %v487
        %v1257 = vunpack.c.h.b16 %v487
        %v1258 = vunpack.c.l.b16 %v488
        %v1259 = vunpack.c.h.b16 %v488
        %v1260 = vunpack.c.l.b16 %v489
        %v1261 = vunpack.c.h.b16 %v489
        %v1262 = vunpack.c.l.b16 %v490
        %v1263 = vunpack.c.h.b16 %v490
        %v1264 = vunpack.c.l.b16 %v491
        %v1265 = vunpack.c.h.b16 %v491
        %v1266 = vunpack.c.l.b16 %v492
        %v1267 = vunpack.c.h.b16 %v492
        %v1268 = vunpack.c.l.b16 %v493
        %v1269 = vunpack.c.h.b16 %v493
        %v1270 = vunpack.c.l.b16 %v494
        %v1271 = vunpack.c.h.b16 %v494
        %v1272 = vunpack.c.l.b16 %v495
        %v1273 = vunpack.c.h.b16 %v495
        %v1274 = vunpack.c.l.b16 %v496
        %v1275 = vunpack.c.h.b16 %v496
        %v1276 = vunpack.c.l.b16 %v497
        %v1277 = vunpack.c.h.b16 %v497
        %v1278 = vunpack.c.l.b16 %v498
        %v1279 = vunpack.c.h.b16 %v498
        %v1280 = vunpack.c.l.b16 %v499
        %v1281 = vunpack.c.h.b16 %v499
        %v1282 = vunpack.c.l.b16 %v500
        %v1283 = vunpack.c.h.b16 %v500
        %v1284 = vunpack.c.l.b16 %v501
        %v1285 = vunpack.c.h.b16 %v501
        %v1286 = vunpack.c.l.b16 %v502
        %v1287 = vunpack.c.h.b16 %v502
        %v1288 = vunpack.c.l.b16 %v503
        %v1289 = vunpack.c.h.b16 %v503
        %v1290 = vpack.c.b16 %v786, %v778
        %v1291 = vpack.c.b16 %v787, %v779
        %v1292 = vpack.c.b16 %v788, %v780
        %v1293 = vpack.c.b16 %v789, %v781
        %v1294 = vpack.c.b16 %v790, %v782
        %v1295 = vpack.c.b16 %v791, %v783
        %v1296 = vpack.c.b16 %v792, %v784
        %v1297 = vpack.c.b16 %v793, %v785
        %v1298 = vpack.c.b16 %v802, %v794
        %v1299 = vpack.c.b16 %v803, %v795
        %v1300 = vpack.c.b16 %v804, %v796
        %v1301 = vpack.c.b16 %v805, %v797
        %v1302 = vpack.c.b16 %v806, %v798
        %v1303 = vpack.c.b16 %v807, %v799
        %v1304 = vpack.c.b16 %v808, %v800
        %v1305 = vpack.c.b16 %v809, %v801
        %v1306 = vpack.c.b16 %v818, %v810
        %v1307 = vpack.c.b16 %v819, %v811
        %v1308 = vpack.c.b16 %v820, %v812
        %v1309 = vpack.c.b16 %v821, %v813
        %v1310 = vpack.c.b16 %v822, %v814
        %v1311 = vpack.c.b16 %v823, %v815
        %v1312 = vpack.c.b16 %v824, %v816
        %v1313 = vpack.c.b16 %v825, %v817
        %v1314 = vpack.c.b16 %v834, %v826
        %v1315 = vpack.c.b16 %v835, %v827
        %v1316 = vpack.c.b16 %v836, %v828
        %v1317 = vpack.c.b16 %v837, %v829
        %v1318 = vpack.c.b16 %v838, %v830
        %v1319 = vpack.c.b16 %v839, %v831
        %v1320 = vpack.c.b16 %v840, %v832
        %v1321 = vpack.c.b16 %v841, %v833
        %v1322 = vpack.c.b16 %v850, %v842
        %v1323 = vpack.c.b16 %v851, %v843
        %v1324 = vpack.c.b16 %v852, %v844
        %v1325 = vpack.c.b16 %v853, %v845
        %v1326 = vpack.c.b16 %v854, %v846
        %v1327 = vpack.c.b16 %v855, %v847
        %v1328 = vpack.c.b16 %v856, %v848
        %v1329 = vpack.c.b16 %v857, %v849
        %v1330 = vpack.c.b16 %v866, %v858
        %v1331 = vpack.c.b16 %v867, %v859
        %v1332 = vpack.c.b16 %v868, %v860
        %v1333 = vpack.c.b16 %v869, %v861
        %v1334 = vpack.c.b16 %v870, %v862
        %v1335 = vpack.c.b16 %v871, %v863
        %v1336 = vpack.c.b16 %v872, %v864
        %v1337 = vpack.c.b16 %v873, %v865
        %v1338 = vpack.c.b16 %v882, %v874
        %v1339 = vpack.c.b16 %v883, %v875
        %v1340 = vpack.c.b16 %v884, %v876
        %v1341 = vpack.c.b16 %v885, %v877
        %v1342 = vpack.c.b16 %v886, %v878
        %v1343 = vpack.c.b16 %v887, %v879
        %v1344 = vpack.c.b16 %v888, %v880
        %v1345 = vpack.c.b16 %v889, %v881
        %v1346 = vpack.c.b16 %v898, %v890
        %v1347 = vpack.c.b16 %v899, %v891
        %v1348 = vpack.c.b16 %v900, %v892
        %v1349 = vpack.c.b16 %v901, %v893
        %v1350 = vpack.c.b16 %v902, %v894
        %v1351 = vpack.c.b16 %v903, %v895
        %v1352 = vpack.c.b16 %v904, %v896
        %v1353 = vpack.c.b16 %v905, %v897
        %v1354 = vpack.c.b16 %v914, %v906
        %v1355 = vpack.c.b16 %v915, %v907
        %v1356 = vpack.c.b16 %v916, %v908
        %v1357 = vpack.c.b16 %v917, %v909
        %v1358 = vpack.c.b16 %v918, %v910
        %v1359 = vpack.c.b16 %v919, %v911
        %v1360 = vpack.c.b16 %v920, %v912
        %v1361 = vpack.c.b16 %v921, %v913
        %v1362 = vpack.c.b16 %v930, %v922
        %v1363 = vpack.c.b16 %v931, %v923
        %v1364 = vpack.c.b16 %v932, %v924
        %v1365 = vpack.c.b16 %v933, %v925
        %v1366 = vpack.c.b16 %v934, %v926
        %v1367 = vpack.c.b16 %v935, %v927
        %v1368 = vpack.c.b16 %v936, %v928
        %v1369 = vpack.c.b16 %v937, %v929
        %v1370 = vpack.c.b16 %v946, %v938
        %v1371 = vpack.c.b16 %v947, %v939
        %v1372 = vpack.c.b16 %v948, %v940
        %v1373 = vpack.c.b16 %v949, %v941
        %v1374 = vpack.c.b16 %v950, %v942
        %v1375 = vpack.c.b16 %v951, %v943
        %v1376 = vpack.c.b16 %v952, %v944
        %v1377 = vpack.c.b16 %v953, %v945
        %v1378 = vpack.c.b16 %v962, %v954
        %v1379 = vpack.c.b16 %v963, %v955
        %v1380 = vpack.c.b16 %v964, %v956
        %v1381 = vpack.c.b16 %v965, %v957
        %v1382 = vpack.c.b16 %v966, %v958
        %v1383 = vpack.c.b16 %v967, %v959
        %v1384 = vpack.c.b16 %v968, %v960
        %v1385 = vpack.c.b16 %v969, %v961
        %v1386 = vpack.c.b16 %v978, %v970
        %v1387 = vpack.c.b16 %v979, %v971
        %v1388 = vpack.c.b16 %v980, %v972
        %v1389 = vpack.c.b16 %v981, %v973
        %v1390 = vpack.c.b16 %v982, %v974
        %v1391 = vpack.c.b16 %v983, %v975
        %v1392 = vpack.c.b16 %v984, %v976
        %v1393 = vpack.c.b16 %v985, %v977
        %v1394 = vpack.c.b16 %v994, %v986
        %v1395 = vpack.c.b16 %v995, %v987
        %v1396 = vpack.c.b16 %v996, %v988
        %v1397 = vpack.c.b16 %v997, %v989
        %v1398 = vpack.c.b16 %v998, %v990
        %v1399 = vpack.c.b16 %v999, %v991
        %v1400 = vpack.c.b16 %v1000, %v992
        %v1401 = vpack.c.b16 %v1001, %v993
        %v1402 = vpack.c.b16 %v1010, %v1002
        %v1403 = vpack.c.b16 %v1011, %v1003
        %v1404 = vpack.c.b16 %v1012, %v1004
        %v1405 = vpack.c.b16 %v1013, %v1005
        %v1406 = vpack.c.b16 %v1014, %v1006
        %v1407 = vpack.c.b16 %v1015, %v1007
        %v1408 = vpack.c.b16 %v1016, %v1008
        %v1409 = vpack.c.b16 %v1017, %v1009
        %v1410 = vpack.c.b16 %v1026, %v1018
        %v1411 = vpack.c.b16 %v1027, %v1019
        %v1412 = vpack.c.b16 %v1028, %v1020
        %v1413 = vpack.c.b16 %v1029, %v1021
        %v1414 = vpack.c.b16 %v1030, %v1022
        %v1415 = vpack.c.b16 %v1031, %v1023
        %v1416 = vpack.c.b16 %v1032, %v1024
        %v1417 = vpack.c.b16 %v1033, %v1025
        %v1418 = vpack.c.b16 %v1042, %v1034
        %v1419 = vpack.c.b16 %v1043, %v1035
        %v1420 = vpack.c.b16 %v1044, %v1036
        %v1421 = vpack.c.b16 %v1045, %v1037
        %v1422 = vpack.c.b16 %v1046, %v1038
        %v1423 = vpack.c.b16 %v1047, %v1039
        %v1424 = vpack.c.b16 %v1048, %v1040
        %v1425 = vpack.c.b16 %v1049, %v1041
        %v1426 = vpack.c.b16 %v1058, %v1050
        %v1427 = vpack.c.b16 %v1059, %v1051
        %v1428 = vpack.c.b16 %v1060, %v1052
        %v1429 = vpack.c.b16 %v1061, %v1053
        %v1430 = vpack.c.b16 %v1062, %v1054
        %v1431 = vpack.c.b16 %v1063, %v1055
        %v1432 = vpack.c.b16 %v1064, %v1056
        %v1433 = vpack.c.b16 %v1065, %v1057
        %v1434 = vpack.c.b16 %v1074, %v1066
        %v1435 = vpack.c.b16 %v1075, %v1067
        %v1436 = vpack.c.b16 %v1076, %v1068
        %v1437 = vpack.c.b16 %v1077, %v1069
        %v1438 = vpack.c.b16 %v1078, %v1070
        %v1439 = vpack.c.b16 %v1079, %v1071
        %v1440 = vpack.c.b16 %v1080, %v1072
        %v1441 = vpack.c.b16 %v1081, %v1073
        %v1442 = vpack.c.b16 %v1090, %v1082
        %v1443 = vpack.c.b16 %v1091, %v1083
        %v1444 = vpack.c.b16 %v1092, %v1084
        %v1445 = vpack.c.b16 %v1093, %v1085
        %v1446 = vpack.c.b16 %v1094, %v1086
        %v1447 = vpack.c.b16 %v1095, %v1087
        %v1448 = vpack.c.b16 %v1096, %v1088
        %v1449 = vpack.c.b16 %v1097, %v1089
        %v1450 = vpack.c.b16 %v1106, %v1098
        %v1451 = vpack.c.b16 %v1107, %v1099
        %v1452 = vpack.c.b16 %v1108, %v1100
        %v1453 = vpack.c.b16 %v1109, %v1101
        %v1454 = vpack.c.b16 %v1110, %v1102
        %v1455 = vpack.c.b16 %v1111, %v1103
        %v1456 = vpack.c.b16 %v1112, %v1104
        %v1457 = vpack.c.b16 %v1113, %v1105
        %v1458 = vpack.c.b16 %v1122, %v1114
        %v1459 = vpack.c.b16 %v1123, %v1115
        %v1460 = vpack.c.b16 %v1124, %v1116
        %v1461 = vpack.c.b16 %v1125, %v1117
        %v1462 = vpack.c.b16 %v1126, %v1118
        %v1463 = vpack.c.b16 %v1127, %v1119
        %v1464 = vpack.c.b16 %v1128, %v1120
        %v1465 = vpack.c.b16 %v1129, %v1121
        %v1466 = vpack.c.b16 %v1138, %v1130
        %v1467 = vpack.c.b16 %v1139, %v1131
        %v1468 = vpack.c.b16 %v1140, %v1132
        %v1469 = vpack.c.b16 %v1141, %v1133
        %v1470 = vpack.c.b16 %v1142, %v1134
        %v1471 = vpack.c.b16 %v1143, %v1135
        %v1472 = vpack.c.b16 %v1144, %v1136
        %v1473 = vpack.c.b16 %v1145, %v1137
        %v1474 = vpack.c.b16 %v1154, %v1146
        %v1475 = vpack.c.b16 %v1155, %v1147
        %v1476 = vpack.c.b16 %v1156, %v1148
        %v1477 = vpack.c.b16 %v1157, %v1149
        %v1478 = vpack.c.b16 %v1158, %v1150
        %v1479 = vpack.c.b16 %v1159, %v1151
        %v1480 = vpack.c.b16 %v1160, %v1152
        %v1481 = vpack.c.b16 %v1161, %v1153
        %v1482 = vpack.c.b16 %v1170, %v1162
        %v1483 = vpack.c.b16 %v1171, %v1163
        %v1484 = vpack.c.b16 %v1172, %v1164
        %v1485 = vpack.c.b16 %v1173, %v1165
        %v1486 = vpack.c.b16 %v1174, %v1166
        %v1487 = vpack.c.b16 %v1175, %v1167
        %v1488 = vpack.c.b16 %v1176, %v1168
        %v1489 = vpack.c.b16 %v1177, %v1169
        %v1490 = vpack.c.b16 %v1186, %v1178
        %v1491 = vpack.c.b16 %v1187, %v1179
        %v1492 = vpack.c.b16 %v1188, %v1180
        %v1493 = vpack.c.b16 %v1189, %v1181
        %v1494 = vpack.c.b16 %v1190, %v1182
        %v1495 = vpack.c.b16 %v1191, %v1183
        %v1496 = vpack.c.b16 %v1192, %v1184
        %v1497 = vpack.c.b16 %v1193, %v1185
        %v1498 = vpack.c.b16 %v1202, %v1194
        %v1499 = vpack.c.b16 %v1203, %v1195
        %v1500 = vpack.c.b16 %v1204, %v1196
        %v1501 = vpack.c.b16 %v1205, %v1197
        %v1502 = vpack.c.b16 %v1206, %v1198
        %v1503 = vpack.c.b16 %v1207, %v1199
        %v1504 = vpack.c.b16 %v1208, %v1200
        %v1505 = vpack.c.b16 %v1209, %v1201
        %v1506 = vpack.c.b16 %v1218, %v1210
        %v1507 = vpack.c.b16 %v1219, %v1211
        %v1508 = vpack.c.b16 %v1220, %v1212
        %v1509 = vpack.c.b16 %v1221, %v1213
        %v1510 = vpack.c.b16 %v1222, %v1214
        %v1511 = vpack.c.b16 %v1223, %v1215
        %v1512 = vpack.c.b16 %v1224, %v1216
        %v1513 = vpack.c.b16 %v1225, %v1217
        %v1514 = vpack.c.b16 %v1234, %v1226
        %v1515 = vpack.c.b16 %v1235, %v1227
        %v1516 = vpack.c.b16 %v1236, %v1228
        %v1517 = vpack.c.b16 %v1237, %v1229
        %v1518 = vpack.c.b16 %v1238, %v1230
        %v1519 = vpack.c.b16 %v1239, %v1231
        %v1520 = vpack.c.b16 %v1240, %v1232
        %v1521 = vpack.c.b16 %v1241, %v1233
        %v1522 = vpack.c.b16 %v1250, %v1242
        %v1523 = vpack.c.b16 %v1251, %v1243
        %v1524 = vpack.c.b16 %v1252, %v1244
        %v1525 = vpack.c.b16 %v1253, %v1245
        %v1526 = vpack.c.b16 %v1254, %v1246
        %v1527 = vpack.c.b16 %v1255, %v1247
        %v1528 = vpack.c.b16 %v1256, %v1248
        %v1529 = vpack.c.b16 %v1257, %v1249
        %v1530 = vpack.c.b16 %v1266, %v1258
        %v1531 = vpack.c.b16 %v1267, %v1259
        %v1532 = vpack.c.b16 %v1268, %v1260
        %v1533 = vpack.c.b16 %v1269, %v1261
        %v1534 = vpack.c.b16 %v1270, %v1262
        %v1535 = vpack.c.b16 %v1271, %v1263
        %v1536 = vpack.c.b16 %v1272, %v1264
        %v1537 = vpack.c.b16 %v1273, %v1265
        %v1538 = vpack.c.b16 %v1282, %v1274
        %v1539 = vpack.c.b16 %v1283, %v1275
        %v1540 = vpack.c.b16 %v1284, %v1276
        %v1541 = vpack.c.b16 %v1285, %v1277
        %v1542 = vpack.c.b16 %v1286, %v1278
        %v1543 = vpack.c.b16 %v1287, %v1279
        %v1544 = vpack.c.b16 %v1288, %v1280
        %v1545 = vpack.c.b16 %v1289, %v1281
        %1802 = vmatpush.bf16.msra.mxu0 %v1346
        %1803 = vmatpush.bf16.msra.mxu0 %v1338
        %1804 = vmatpush.bf16.msra.mxu0 %v1330
        %1805 = vmatpush.bf16.msra.mxu0 %v1322
        %1806 = vmatpush.bf16.msra.mxu0 %v1314
        %1807 = vmatpush.bf16.msra.mxu0 %v1306
        %1808 = vmatpush.bf16.msra.mxu0 %v1298
        %1809 = vmatpush.bf16.msra.mxu0 %v1290
        %1810 = vmatmul.bf16.gmra.mxu0 %v244
        %v1811 = vpop.f32.mrf.mxu0
        %v1812 = vadd.f32 %v506, %v1811
        %v1813 = vpop.f32.mrf.mxu0
        %1814 = vdwg.mxu0
        %1815 = vmatpush.bf16.msra.mxu0 %v1410
        %1816 = vmatpush.bf16.msra.mxu0 %v1402
        %1817 = vmatpush.bf16.msra.mxu0 %v1394
        %1818 = vmatpush.bf16.msra.mxu0 %v1386
        %1819 = vmatpush.bf16.msra.mxu0 %v1378
        %1820 = vmatpush.bf16.msra.mxu0 %v1370
        %1821 = vmatpush.bf16.msra.mxu0 %v1362
        %1822 = vmatpush.bf16.msra.mxu0 %v1354
        %1823 = vmatmul.bf16.gmra.mxu0 %v245
        %v1824 = vpop.f32.mrf.mxu0
        %v1825 = vadd.f32 %v1812, %v1824
        %v1826 = vpop.f32.mrf.mxu0
        %1827 = vdwg.mxu0
        %1828 = vmatpush.bf16.msra.mxu0 %v1474
        %1829 = vmatpush.bf16.msra.mxu0 %v1466
        %1830 = vmatpush.bf16.msra.mxu0 %v1458
        %1831 = vmatpush.bf16.msra.mxu0 %v1450
        %1832 = vmatpush.bf16.msra.mxu0 %v1442
        %1833 = vmatpush.bf16.msra.mxu0 %v1434
        %1834 = vmatpush.bf16.msra.mxu0 %v1426
        %1835 = vmatpush.bf16.msra.mxu0 %v1418
        %1836 = vmatmul.bf16.gmra.mxu0 %v246
        %v1837 = vpop.f32.mrf.mxu0
        %v1838 = vadd.f32 %v1825, %v1837
        %v1839 = vpop.f32.mrf.mxu0
        %1840 = vdwg.mxu0
        %1841 = vmatpush.bf16.msra.mxu0 %v1538
        %1842 = vmatpush.bf16.msra.mxu0 %v1530
        %1843 = vmatpush.bf16.msra.mxu0 %v1522
        %1844 = vmatpush.bf16.msra.mxu0 %v1514
        %1845 = vmatpush.bf16.msra.mxu0 %v1506
        %1846 = vmatpush.bf16.msra.mxu0 %v1498
        %1847 = vmatpush.bf16.msra.mxu0 %v1490
        %1848 = vmatpush.bf16.msra.mxu0 %v1482
        %1849 = vmatmul.bf16.gmra.mxu0 %v247
        %v1850 = vpop.f32.mrf.mxu0
        %v1851 = vadd.f32 %v1838, %v1850
        %v1852 = vpop.f32.mrf.mxu0
        %1853 = vdwg.mxu0
        %1854 = vmatpush.bf16.msra.mxu0 %v1347
        %1855 = vmatpush.bf16.msra.mxu0 %v1339
        %1856 = vmatpush.bf16.msra.mxu0 %v1331
        %1857 = vmatpush.bf16.msra.mxu0 %v1323
        %1858 = vmatpush.bf16.msra.mxu0 %v1315
        %1859 = vmatpush.bf16.msra.mxu0 %v1307
        %1860 = vmatpush.bf16.msra.mxu0 %v1299
        %1861 = vmatpush.bf16.msra.mxu0 %v1291
        %1862 = vmatmul.bf16.gmra.mxu0 %v244
        %v1863 = vpop.f32.mrf.mxu0
        %v1864 = vadd.f32 %v507, %v1863
        %v1865 = vpop.f32.mrf.mxu0
        %1866 = vdwg.mxu0
        %1867 = vmatpush.bf16.msra.mxu0 %v1411
        %1868 = vmatpush.bf16.msra.mxu0 %v1403
        %1869 = vmatpush.bf16.msra.mxu0 %v1395
        %1870 = vmatpush.bf16.msra.mxu0 %v1387
        %1871 = vmatpush.bf16.msra.mxu0 %v1379
        %1872 = vmatpush.bf16.msra.mxu0 %v1371
        %1873 = vmatpush.bf16.msra.mxu0 %v1363
        %1874 = vmatpush.bf16.msra.mxu0 %v1355
        %1875 = vmatmul.bf16.gmra.mxu0 %v245
        %v1876 = vpop.f32.mrf.mxu0
        %v1877 = vadd.f32 %v1864, %v1876
        %v1878 = vpop.f32.mrf.mxu0
        %1879 = vdwg.mxu0
        %1880 = vmatpush.bf16.msra.mxu0 %v1475
        %1881 = vmatpush.bf16.msra.mxu0 %v1467
        %1882 = vmatpush.bf16.msra.mxu0 %v1459
        %1883 = vmatpush.bf16.msra.mxu0 %v1451
        %1884 = vmatpush.bf16.msra.mxu0 %v1443
        %1885 = vmatpush.bf16.msra.mxu0 %v1435
        %1886 = vmatpush.bf16.msra.mxu0 %v1427
        %1887 = vmatpush.bf16.msra.mxu0 %v1419
        %1888 = vmatmul.bf16.gmra.mxu0 %v246
        %v1889 = vpop.f32.mrf.mxu0
        %v1890 = vadd.f32 %v1877, %v1889
        %v1891 = vpop.f32.mrf.mxu0
        %1892 = vdwg.mxu0
        %1893 = vmatpush.bf16.msra.mxu0 %v1539
        %1894 = vmatpush.bf16.msra.mxu0 %v1531
        %1895 = vmatpush.bf16.msra.mxu0 %v1523
        %1896 = vmatpush.bf16.msra.mxu0 %v1515
        %1897 = vmatpush.bf16.msra.mxu0 %v1507
        %1898 = vmatpush.bf16.msra.mxu0 %v1499
        %1899 = vmatpush.bf16.msra.mxu0 %v1491
        %1900 = vmatpush.bf16.msra.mxu0 %v1483
        %1901 = vmatmul.bf16.gmra.mxu0 %v247
        %v1902 = vpop.f32.mrf.mxu0
        %v1903 = vadd.f32 %v1890, %v1902
        %v1904 = vpop.f32.mrf.mxu0
        %1905 = vdwg.mxu0
        %1906 = vmatpush.bf16.msra.mxu0 %v1348
        %1907 = vmatpush.bf16.msra.mxu0 %v1340
        %1908 = vmatpush.bf16.msra.mxu0 %v1332
        %1909 = vmatpush.bf16.msra.mxu0 %v1324
        %1910 = vmatpush.bf16.msra.mxu0 %v1316
        %1911 = vmatpush.bf16.msra.mxu0 %v1308
        %1912 = vmatpush.bf16.msra.mxu0 %v1300
        %1913 = vmatpush.bf16.msra.mxu0 %v1292
        %1914 = vmatmul.bf16.gmra.mxu0 %v244
        %v1915 = vpop.f32.mrf.mxu0
        %v1916 = vadd.f32 %v508, %v1915
        %v1917 = vpop.f32.mrf.mxu0
        %1918 = vdwg.mxu0
        %1919 = vmatpush.bf16.msra.mxu0 %v1412
        %1920 = vmatpush.bf16.msra.mxu0 %v1404
        %1921 = vmatpush.bf16.msra.mxu0 %v1396
        %1922 = vmatpush.bf16.msra.mxu0 %v1388
        %1923 = vmatpush.bf16.msra.mxu0 %v1380
        %1924 = vmatpush.bf16.msra.mxu0 %v1372
        %1925 = vmatpush.bf16.msra.mxu0 %v1364
        %1926 = vmatpush.bf16.msra.mxu0 %v1356
        %1927 = vmatmul.bf16.gmra.mxu0 %v245
        %v1928 = vpop.f32.mrf.mxu0
        %v1929 = vadd.f32 %v1916, %v1928
        %v1930 = vpop.f32.mrf.mxu0
        %1931 = vdwg.mxu0
        %1932 = vmatpush.bf16.msra.mxu0 %v1476
        %1933 = vmatpush.bf16.msra.mxu0 %v1468
        %1934 = vmatpush.bf16.msra.mxu0 %v1460
        %1935 = vmatpush.bf16.msra.mxu0 %v1452
        %1936 = vmatpush.bf16.msra.mxu0 %v1444
        %1937 = vmatpush.bf16.msra.mxu0 %v1436
        %1938 = vmatpush.bf16.msra.mxu0 %v1428
        %1939 = vmatpush.bf16.msra.mxu0 %v1420
        %1940 = vmatmul.bf16.gmra.mxu0 %v246
        %v1941 = vpop.f32.mrf.mxu0
        %v1942 = vadd.f32 %v1929, %v1941
        %v1943 = vpop.f32.mrf.mxu0
        %1944 = vdwg.mxu0
        %1945 = vmatpush.bf16.msra.mxu0 %v1540
        %1946 = vmatpush.bf16.msra.mxu0 %v1532
        %1947 = vmatpush.bf16.msra.mxu0 %v1524
        %1948 = vmatpush.bf16.msra.mxu0 %v1516
        %1949 = vmatpush.bf16.msra.mxu0 %v1508
        %1950 = vmatpush.bf16.msra.mxu0 %v1500
        %1951 = vmatpush.bf16.msra.mxu0 %v1492
        %1952 = vmatpush.bf16.msra.mxu0 %v1484
        %1953 = vmatmul.bf16.gmra.mxu0 %v247
        %v1954 = vpop.f32.mrf.mxu0
        %v1955 = vadd.f32 %v1942, %v1954
        %v1956 = vpop.f32.mrf.mxu0
        %1957 = vdwg.mxu0
        %1958 = vmatpush.bf16.msra.mxu0 %v1349
        %1959 = vmatpush.bf16.msra.mxu0 %v1341
        %1960 = vmatpush.bf16.msra.mxu0 %v1333
        %1961 = vmatpush.bf16.msra.mxu0 %v1325
        %1962 = vmatpush.bf16.msra.mxu0 %v1317
        %1963 = vmatpush.bf16.msra.mxu0 %v1309
        %1964 = vmatpush.bf16.msra.mxu0 %v1301
        %1965 = vmatpush.bf16.msra.mxu0 %v1293
        %1966 = vmatmul.bf16.gmra.mxu0 %v244
        %v1967 = vpop.f32.mrf.mxu0
        %v1968 = vadd.f32 %v509, %v1967
        %v1969 = vpop.f32.mrf.mxu0
        %1970 = vdwg.mxu0
        %1971 = vmatpush.bf16.msra.mxu0 %v1413
        %1972 = vmatpush.bf16.msra.mxu0 %v1405
        %1973 = vmatpush.bf16.msra.mxu0 %v1397
        %1974 = vmatpush.bf16.msra.mxu0 %v1389
        %1975 = vmatpush.bf16.msra.mxu0 %v1381
        %1976 = vmatpush.bf16.msra.mxu0 %v1373
        %1977 = vmatpush.bf16.msra.mxu0 %v1365
        %1978 = vmatpush.bf16.msra.mxu0 %v1357
        %1979 = vmatmul.bf16.gmra.mxu0 %v245
        %v1980 = vpop.f32.mrf.mxu0
        %v1981 = vadd.f32 %v1968, %v1980
        %v1982 = vpop.f32.mrf.mxu0
        %1983 = vdwg.mxu0
        %1984 = vmatpush.bf16.msra.mxu0 %v1477
        %1985 = vmatpush.bf16.msra.mxu0 %v1469
        %1986 = vmatpush.bf16.msra.mxu0 %v1461
        %1987 = vmatpush.bf16.msra.mxu0 %v1453
        %1988 = vmatpush.bf16.msra.mxu0 %v1445
        %1989 = vmatpush.bf16.msra.mxu0 %v1437
        %1990 = vmatpush.bf16.msra.mxu0 %v1429
        %1991 = vmatpush.bf16.msra.mxu0 %v1421
        %1992 = vmatmul.bf16.gmra.mxu0 %v246
        %v1993 = vpop.f32.mrf.mxu0
        %v1994 = vadd.f32 %v1981, %v1993
        %v1995 = vpop.f32.mrf.mxu0
        %1996 = vdwg.mxu0
        %1997 = vmatpush.bf16.msra.mxu0 %v1541
        %1998 = vmatpush.bf16.msra.mxu0 %v1533
        %1999 = vmatpush.bf16.msra.mxu0 %v1525
        %2000 = vmatpush.bf16.msra.mxu0 %v1517
        %2001 = vmatpush.bf16.msra.mxu0 %v1509
        %2002 = vmatpush.bf16.msra.mxu0 %v1501
        %2003 = vmatpush.bf16.msra.mxu0 %v1493
        %2004 = vmatpush.bf16.msra.mxu0 %v1485
        %2005 = vmatmul.bf16.gmra.mxu0 %v247
        %v2006 = vpop.f32.mrf.mxu0
        %v2007 = vadd.f32 %v1994, %v2006
        %v2008 = vpop.f32.mrf.mxu0
        %2009 = vdwg.mxu0
        %2010 = vmatpush.bf16.msra.mxu0 %v1350
        %2011 = vmatpush.bf16.msra.mxu0 %v1342
        %2012 = vmatpush.bf16.msra.mxu0 %v1334
        %2013 = vmatpush.bf16.msra.mxu0 %v1326
        %2014 = vmatpush.bf16.msra.mxu0 %v1318
        %2015 = vmatpush.bf16.msra.mxu0 %v1310
        %2016 = vmatpush.bf16.msra.mxu0 %v1302
        %2017 = vmatpush.bf16.msra.mxu0 %v1294
        %2018 = vmatmul.bf16.gmra.mxu0 %v244
        %v2019 = vpop.f32.mrf.mxu0
        %v2020 = vadd.f32 %v510, %v2019
        %v2021 = vpop.f32.mrf.mxu0
        %2022 = vdwg.mxu0
        %2023 = vmatpush.bf16.msra.mxu0 %v1414
        %2024 = vmatpush.bf16.msra.mxu0 %v1406
        %2025 = vmatpush.bf16.msra.mxu0 %v1398
        %2026 = vmatpush.bf16.msra.mxu0 %v1390
        %2027 = vmatpush.bf16.msra.mxu0 %v1382
        %2028 = vmatpush.bf16.msra.mxu0 %v1374
        %2029 = vmatpush.bf16.msra.mxu0 %v1366
        %2030 = vmatpush.bf16.msra.mxu0 %v1358
        %2031 = vmatmul.bf16.gmra.mxu0 %v245
        %v2032 = vpop.f32.mrf.mxu0
        %v2033 = vadd.f32 %v2020, %v2032
        %v2034 = vpop.f32.mrf.mxu0
        %2035 = vdwg.mxu0
        %2036 = vmatpush.bf16.msra.mxu0 %v1478
        %2037 = vmatpush.bf16.msra.mxu0 %v1470
        %2038 = vmatpush.bf16.msra.mxu0 %v1462
        %2039 = vmatpush.bf16.msra.mxu0 %v1454
        %2040 = vmatpush.bf16.msra.mxu0 %v1446
        %2041 = vmatpush.bf16.msra.mxu0 %v1438
        %2042 = vmatpush.bf16.msra.mxu0 %v1430
        %2043 = vmatpush.bf16.msra.mxu0 %v1422
        %2044 = vmatmul.bf16.gmra.mxu0 %v246
        %v2045 = vpop.f32.mrf.mxu0
        %v2046 = vadd.f32 %v2033, %v2045
        %v2047 = vpop.f32.mrf.mxu0
        %2048 = vdwg.mxu0
        %2049 = vmatpush.bf16.msra.mxu0 %v1542
        %2050 = vmatpush.bf16.msra.mxu0 %v1534
        %2051 = vmatpush.bf16.msra.mxu0 %v1526
        %2052 = vmatpush.bf16.msra.mxu0 %v1518
        %2053 = vmatpush.bf16.msra.mxu0 %v1510
        %2054 = vmatpush.bf16.msra.mxu0 %v1502
        %2055 = vmatpush.bf16.msra.mxu0 %v1494
        %2056 = vmatpush.bf16.msra.mxu0 %v1486
        %2057 = vmatmul.bf16.gmra.mxu0 %v247
        %v2058 = vpop.f32.mrf.mxu0
        %v2059 = vadd.f32 %v2046, %v2058
        %v2060 = vpop.f32.mrf.mxu0
        %2061 = vdwg.mxu0
        %2062 = vmatpush.bf16.msra.mxu0 %v1351
        %2063 = vmatpush.bf16.msra.mxu0 %v1343
        %2064 = vmatpush.bf16.msra.mxu0 %v1335
        %2065 = vmatpush.bf16.msra.mxu0 %v1327
        %2066 = vmatpush.bf16.msra.mxu0 %v1319
        %2067 = vmatpush.bf16.msra.mxu0 %v1311
        %2068 = vmatpush.bf16.msra.mxu0 %v1303
        %2069 = vmatpush.bf16.msra.mxu0 %v1295
        %2070 = vmatmul.bf16.gmra.mxu0 %v244
        %v2071 = vpop.f32.mrf.mxu0
        %v2072 = vadd.f32 %v511, %v2071
        %v2073 = vpop.f32.mrf.mxu0
        %2074 = vdwg.mxu0
        %2075 = vmatpush.bf16.msra.mxu0 %v1415
        %2076 = vmatpush.bf16.msra.mxu0 %v1407
        %2077 = vmatpush.bf16.msra.mxu0 %v1399
        %2078 = vmatpush.bf16.msra.mxu0 %v1391
        %2079 = vmatpush.bf16.msra.mxu0 %v1383
        %2080 = vmatpush.bf16.msra.mxu0 %v1375
        %2081 = vmatpush.bf16.msra.mxu0 %v1367
        %2082 = vmatpush.bf16.msra.mxu0 %v1359
        %2083 = vmatmul.bf16.gmra.mxu0 %v245
        %v2084 = vpop.f32.mrf.mxu0
        %v2085 = vadd.f32 %v2072, %v2084
        %v2086 = vpop.f32.mrf.mxu0
        %2087 = vdwg.mxu0
        %2088 = vmatpush.bf16.msra.mxu0 %v1479
        %2089 = vmatpush.bf16.msra.mxu0 %v1471
        %2090 = vmatpush.bf16.msra.mxu0 %v1463
        %2091 = vmatpush.bf16.msra.mxu0 %v1455
        %2092 = vmatpush.bf16.msra.mxu0 %v1447
        %2093 = vmatpush.bf16.msra.mxu0 %v1439
        %2094 = vmatpush.bf16.msra.mxu0 %v1431
        %2095 = vmatpush.bf16.msra.mxu0 %v1423
        %2096 = vmatmul.bf16.gmra.mxu0 %v246
        %v2097 = vpop.f32.mrf.mxu0
        %v2098 = vadd.f32 %v2085, %v2097
        %v2099 = vpop.f32.mrf.mxu0
        %2100 = vdwg.mxu0
        %2101 = vmatpush.bf16.msra.mxu0 %v1543
        %2102 = vmatpush.bf16.msra.mxu0 %v1535
        %2103 = vmatpush.bf16.msra.mxu0 %v1527
        %2104 = vmatpush.bf16.msra.mxu0 %v1519
        %2105 = vmatpush.bf16.msra.mxu0 %v1511
        %2106 = vmatpush.bf16.msra.mxu0 %v1503
        %2107 = vmatpush.bf16.msra.mxu0 %v1495
        %2108 = vmatpush.bf16.msra.mxu0 %v1487
        %2109 = vmatmul.bf16.gmra.mxu0 %v247
        %v2110 = vpop.f32.mrf.mxu0
        %v2111 = vadd.f32 %v2098, %v2110
        %v2112 = vpop.f32.mrf.mxu0
        %2113 = vdwg.mxu0
        %2114 = vmatpush.bf16.msra.mxu0 %v1352
        %2115 = vmatpush.bf16.msra.mxu0 %v1344
        %2116 = vmatpush.bf16.msra.mxu0 %v1336
        %2117 = vmatpush.bf16.msra.mxu0 %v1328
        %2118 = vmatpush.bf16.msra.mxu0 %v1320
        %2119 = vmatpush.bf16.msra.mxu0 %v1312
        %2120 = vmatpush.bf16.msra.mxu0 %v1304
        %2121 = vmatpush.bf16.msra.mxu0 %v1296
        %2122 = vmatmul.bf16.gmra.mxu0 %v244
        %v2123 = vpop.f32.mrf.mxu0
        %v2124 = vadd.f32 %v512, %v2123
        %v2125 = vpop.f32.mrf.mxu0
        %2126 = vdwg.mxu0
        %2127 = vmatpush.bf16.msra.mxu0 %v1416
        %2128 = vmatpush.bf16.msra.mxu0 %v1408
        %2129 = vmatpush.bf16.msra.mxu0 %v1400
        %2130 = vmatpush.bf16.msra.mxu0 %v1392
        %2131 = vmatpush.bf16.msra.mxu0 %v1384
        %2132 = vmatpush.bf16.msra.mxu0 %v1376
        %2133 = vmatpush.bf16.msra.mxu0 %v1368
        %2134 = vmatpush.bf16.msra.mxu0 %v1360
        %2135 = vmatmul.bf16.gmra.mxu0 %v245
        %v2136 = vpop.f32.mrf.mxu0
        %v2137 = vadd.f32 %v2124, %v2136
        %v2138 = vpop.f32.mrf.mxu0
        %2139 = vdwg.mxu0
        %2140 = vmatpush.bf16.msra.mxu0 %v1480
        %2141 = vmatpush.bf16.msra.mxu0 %v1472
        %2142 = vmatpush.bf16.msra.mxu0 %v1464
        %2143 = vmatpush.bf16.msra.mxu0 %v1456
        %2144 = vmatpush.bf16.msra.mxu0 %v1448
        %2145 = vmatpush.bf16.msra.mxu0 %v1440
        %2146 = vmatpush.bf16.msra.mxu0 %v1432
        %2147 = vmatpush.bf16.msra.mxu0 %v1424
        %2148 = vmatmul.bf16.gmra.mxu0 %v246
        %v2149 = vpop.f32.mrf.mxu0
        %v2150 = vadd.f32 %v2137, %v2149
        %v2151 = vpop.f32.mrf.mxu0
        %2152 = vdwg.mxu0
        %2153 = vmatpush.bf16.msra.mxu0 %v1544
        %2154 = vmatpush.bf16.msra.mxu0 %v1536
        %2155 = vmatpush.bf16.msra.mxu0 %v1528
        %2156 = vmatpush.bf16.msra.mxu0 %v1520
        %2157 = vmatpush.bf16.msra.mxu0 %v1512
        %2158 = vmatpush.bf16.msra.mxu0 %v1504
        %2159 = vmatpush.bf16.msra.mxu0 %v1496
        %2160 = vmatpush.bf16.msra.mxu0 %v1488
        %2161 = vmatmul.bf16.gmra.mxu0 %v247
        %v2162 = vpop.f32.mrf.mxu0
        %v2163 = vadd.f32 %v2150, %v2162
        %v2164 = vpop.f32.mrf.mxu0
        %2165 = vdwg.mxu0
        %2166 = vmatpush.bf16.msra.mxu0 %v1353
        %2167 = vmatpush.bf16.msra.mxu0 %v1345
        %2168 = vmatpush.bf16.msra.mxu0 %v1337
        %2169 = vmatpush.bf16.msra.mxu0 %v1329
        %2170 = vmatpush.bf16.msra.mxu0 %v1321
        %2171 = vmatpush.bf16.msra.mxu0 %v1313
        %2172 = vmatpush.bf16.msra.mxu0 %v1305
        %2173 = vmatpush.bf16.msra.mxu0 %v1297
        %2174 = vmatmul.bf16.gmra.mxu0 %v244
        %v2175 = vpop.f32.mrf.mxu0
        %v2176 = vadd.f32 %v513, %v2175
        %v2177 = vpop.f32.mrf.mxu0
        %2178 = vdwg.mxu0
        %2179 = vmatpush.bf16.msra.mxu0 %v1417
        %2180 = vmatpush.bf16.msra.mxu0 %v1409
        %2181 = vmatpush.bf16.msra.mxu0 %v1401
        %2182 = vmatpush.bf16.msra.mxu0 %v1393
        %2183 = vmatpush.bf16.msra.mxu0 %v1385
        %2184 = vmatpush.bf16.msra.mxu0 %v1377
        %2185 = vmatpush.bf16.msra.mxu0 %v1369
        %2186 = vmatpush.bf16.msra.mxu0 %v1361
        %2187 = vmatmul.bf16.gmra.mxu0 %v245
        %v2188 = vpop.f32.mrf.mxu0
        %v2189 = vadd.f32 %v2176, %v2188
        %v2190 = vpop.f32.mrf.mxu0
        %2191 = vdwg.mxu0
        %2192 = vmatpush.bf16.msra.mxu0 %v1481
        %2193 = vmatpush.bf16.msra.mxu0 %v1473
        %2194 = vmatpush.bf16.msra.mxu0 %v1465
        %2195 = vmatpush.bf16.msra.mxu0 %v1457
        %2196 = vmatpush.bf16.msra.mxu0 %v1449
        %2197 = vmatpush.bf16.msra.mxu0 %v1441
        %2198 = vmatpush.bf16.msra.mxu0 %v1433
        %2199 = vmatpush.bf16.msra.mxu0 %v1425
        %2200 = vmatmul.bf16.gmra.mxu0 %v246
        %v2201 = vpop.f32.mrf.mxu0
        %v2202 = vadd.f32 %v2189, %v2201
        %v2203 = vpop.f32.mrf.mxu0
        %2204 = vdwg.mxu0
        %2205 = vmatpush.bf16.msra.mxu0 %v1545
        %2206 = vmatpush.bf16.msra.mxu0 %v1537
        %2207 = vmatpush.bf16.msra.mxu0 %v1529
        %2208 = vmatpush.bf16.msra.mxu0 %v1521
        %2209 = vmatpush.bf16.msra.mxu0 %v1513
        %2210 = vmatpush.bf16.msra.mxu0 %v1505
        %2211 = vmatpush.bf16.msra.mxu0 %v1497
        %2212 = vmatpush.bf16.msra.mxu0 %v1489
        %2213 = vmatmul.bf16.gmra.mxu0 %v247
        %v2214 = vpop.f32.mrf.mxu0
        %v2215 = vadd.f32 %v2202, %v2214
        %v2216 = vpop.f32.mrf.mxu0
        %2217 = vdwg.mxu0
        %v2226 = vrot.slane %v1903, 6
        %v2227 = vrot.slane %v1955, 4
        %v2228 = vrot.slane %v2007, 2
        %v2229 = vrot.slane %v2111, 6
        %v2230 = vrot.slane %v2163, 4
        %v2231 = vrot.slane %v2215, 2
        %vm2232 = vcmask 1041408
        %v2233 = vsel %vm2232, %v1851, %v2226
        %vm2234 = vcmask 1045508
        %v2235 = vsel %vm2234, %v2227, %v2228
        %vm2236 = vcmask 1043456
        %v2237 = vsel %vm2236, %v2233, %v2235
        %v2238 = vsel %vm2232, %v2059, %v2229
        %v2239 = vsel %vm2234, %v2230, %v2231
        %v2240 = vsel %vm2236, %v2238, %v2239
        %2243 = vst [vmem:[%s229] sm:$0xff] %v2237
        %2244 = vst [vmem:[%s229 + $0x8] sm:$0xff] %v2240
        %s2245 = sand.u32 %s104, 1
        %s2246 = scalar_lea.sflag [#allocation4], %s2245
        %s2247 = sand.u32 %s104, 1
        %s2248 = smul.addr %s2247, 16
        %s2249 = scalar_lea.vmem [#allocation7], %s2248
        // Predicated region
        $region41: #{linear_fcq_net_forward.1} parent=31 // pred_check
          %p2250 = pneg %p114
        $region42: #{linear_fcq_net_forward.1} parent=31 // pred_check_branch
          %2252 = sbr.rel (%p2250) target = $region44
        $region43: #{linear_fcq_net_forward.1} parent=31 // pred_region
          %s2253 = smul.u32 8, %s23
          %2255 = vsyncadd %s2246, 0
          %s2256 = smul.addr %s2253, 2
          %s2257 = scalar_lea.hbm %s3, %s2256
          %s2259 = sshll.u32 %s2249, 4
          %s2260 = int_to_ptr.vmem [resolvable:$true] %s2259
          %s2261 = sshll.u32 %s2257, 4
          %s2262 = int_to_ptr.hbm [resolvable:$true] %s2261
          %2264 = dma.vmem_to_hbm [thread:$0]  %s2260, 256, %s2262, %s2246
        $region44: #{linear_fcq_net_forward.1} parent=31 // pred_fallthru
          _
      $region32: #{linear_fcq_net_forward.1} parent=5 // pred_fallthru
        _
      %p2265 = scmp.le.s32.totalorder 2, %s18
      // Predicated region
      $region45: #{linear_fcq_net_forward.1} parent=5 // pred_check
        %p2266 = pneg %p2265
      $region46: #{linear_fcq_net_forward.1} parent=5 // pred_check_branch
        %2268 = sbr.rel (%p2266) target = $region48
      $region47: #{linear_fcq_net_forward.1} parent=5 // pred_region
        %s2269 = ssub.s32 %s18, 2
        // Predicated region
        $region49: #{linear_fcq_net_forward.1} parent=47 // pred_check
          %p2270 = pneg %p120
        $region50: #{linear_fcq_net_forward.1} parent=47 // pred_check_branch
          %2272 = sbr.rel (%p2270) target = $region52
        $region51: #{linear_fcq_net_forward.1} parent=47 // pred_region
          %s2273 = sand.u32 %s105, 1
          %s2274 = scalar_lea.sflag [#allocation4], %s2273
          %s2275 = sand.u32 %s105, 1
          %s2276 = smul.addr %s2275, 16
          %s2277 = scalar_lea.vmem [#allocation7], %s2276
          %2279 = dma.done %s2274, 256
        $region52: #{linear_fcq_net_forward.1} parent=47 // pred_fallthru
          _
      $region48: #{linear_fcq_net_forward.1} parent=5 // pred_fallthru
        _
    $region6: #{linear_fcq_net_forward.1} parent=1 // loop_footer
      %s22 = sadd.s32 1, %s18
    $region7: #{linear_fcq_net_forward.1} parent=1 // loop_footer_branch
      %17 = sbr.rel target = $region3
    $region8: #{linear_fcq_net_forward.1} parent=1 // loop_exit
      _
    %2280 = vsyncpa [#allocation3], 1
    %s2281 = scalar_lea.sflag [#allocation3], 1
    %2282 = vsyncpa %s2281, 1
    %2283 = vsyncpa [#allocation6], 1
    %s2284 = scalar_lea.sflag [#allocation6], 1
    %2285 = vsyncpa %s2284, 1
    %2286 = vsyncpa [#allocation4], 1
    %s2287 = scalar_lea.sflag [#allocation4], 1
    %2288 = vsyncpa %s2287, 1

</llo_original>
